<compile_context>
chip_gen: v6e
topology: v6e:2x2x1
jax: 0.10.0
libtpu: 0.0.40
codegen_flags: <defaults>
</compile_context>

<pallas_src>
import jax
import jax.numpy as jnp
from jax.experimental import pallas as pl
from jax.experimental.pallas import tpu as pltpu


def _round_up(x: int, m: int) -> int:
    return ((x + m - 1) // m) * m


def _softmax_last(c):
    """Row softmax over the (small) last axis; reciprocal goes to the EUP."""
    m = jnp.max(c, axis=-1, keepdims=True)
    e = jnp.exp(c - m)
    s = jnp.sum(e, axis=-1, keepdims=True)
    return e * pl.reciprocal(s, approx=True)


# ----------------------------------------------------------------------------
# Path A: resident-W, single pass per m-tile (no K grid, no scratch, no when)
# ----------------------------------------------------------------------------
def _fused_head_kernel_mm(x_ref, wp_ref, bp_ref, wc_ref, bc_ref,
                          pred_ref, conf_ref):
    x = x_ref[...].astype(jnp.bfloat16)                    # cast in-kernel
    pred_ref[...] = (jnp.dot(x, wp_ref[...],
                             preferred_element_type=jnp.float32)
                     + bp_ref[...]).astype(pred_ref.dtype)
    c = jnp.dot(x, wc_ref[...], preferred_element_type=jnp.float32) + bc_ref[...]
    conf_ref[...] = _softmax_last(c).astype(conf_ref.dtype)


def _fused_head_kernel_sm(x_ref, wp_ref, bp_ref, pred_ref, conf_ref):
    x = x_ref[...].astype(jnp.bfloat16)
    pred_ref[...] = (jnp.dot(x, wp_ref[...],
                             preferred_element_type=jnp.float32)
                     + bp_ref[...]).astype(pred_ref.dtype)
    conf_ref[...] = jnp.ones_like(conf_ref)                # res.new_ones((bs,1))


# ----------------------------------------------------------------------------
# Path B: K-tiled fallback (large in_features) with f32 accumulators
# ----------------------------------------------------------------------------
def _ktiled_head_kernel_mm(x_ref, wp_ref, bp_ref, wc_ref, bc_ref,
                           pred_ref, conf_ref, accp_ref, accc_ref):
    k = pl.program_id(1)

    @pl.when(k == 0)
    def _():
        accp_ref[...] = jnp.zeros_like(accp_ref)
        accc_ref[...] = jnp.zeros_like(accc_ref)

    x = x_ref[...].astype(jnp.bfloat16)
    accp_ref[...] += jnp.dot(x, wp_ref[...], preferred_element_type=jnp.float32)
    accc_ref[...] += jnp.dot(x, wc_ref[...], preferred_element_type=jnp.float32)

    @pl.when(k == pl.num_programs(1) - 1)
    def _():
        pred_ref[...] = (accp_ref[...] + bp_ref[...]).astype(pred_ref.dtype)
        conf_ref[...] = _softmax_last(accc_ref[...]
                                      + bc_ref[...]).astype(conf_ref.dtype)


def _ktiled_head_kernel_sm(x_ref, wp_ref, bp_ref, pred_ref, conf_ref, accp_ref):
    k = pl.program_id(1)

    @pl.when(k == 0)
    def _():
        accp_ref[...] = jnp.zeros_like(accp_ref)

    accp_ref[...] += jnp.dot(x_ref[...].astype(jnp.bfloat16), wp_ref[...],
                             preferred_element_type=jnp.float32)

    @pl.when(k == pl.num_programs(1) - 1)
    def _():
        pred_ref[...] = (accp_ref[...] + bp_ref[...]).astype(pred_ref.dtype)
        conf_ref[...] = jnp.ones_like(conf_ref)


# ----------------------------------------------------------------------------
# Model wrapper (mirrors RasterModel.__init__ / forward semantics)
# ----------------------------------------------------------------------------
class RasterModelPallas:
    _RESIDENT_K_MAX = 4096    # full-K resident-W path when in_features <= this
    _TK_MAX_UNITS = 16        # K tile <= 16*128 = 2048 for the tiled fallback

    def __init__(self, config: dict, modes: int = 1, *, raster_hw=(16, 16)):
        self.modes = modes
        self.in_channels = (config["model_params"]["history_num_frames"] + 1) * 2 + 3
        if config["raster_params"]["map_type"] == "semantic_debug":
            self.in_channels = 3
        if config["raster_params"]["map_type"] == "box_debug":
            self.in_channels = (config["model_params"]["history_num_frames"] + 1) * 2
        self.future_len = (config["model_params"]["future_num_frames"]
                           // config["model_params"]["future_step_size"])
        self.num_preds = self.modes * 2 * self.future_len
        self.out_dim = self.num_preds + (self.modes if self.modes != 1 else 0)
        self.multi_mode = self.modes != 1

        H, W = raster_hw
        self.in_features = self.in_channels * H * W

        # ---- path / K layout decision (generation-safe VMEM sizing) --------
        self.resident = self.in_features <= self._RESIDENT_K_MAX
        if self.resident:
            self.k_pad = self.in_features
            self.tk = self.in_features
        else:
            self.k_pad = _round_up(self.in_features, 128)
            units = self.k_pad // 128
            div = max(d for d in range(1, self._TK_MAX_UNITS + 1) if units % d == 0)
            self.tk = 128 * div

        # ---- deterministic parameter init (PyTorch-Linear-style uniform) ---
        k0, k1 = jax.random.split(jax.random.PRNGKey(42))
        bound = 1.0 / float(self.in_features) ** 0.5
        w = jax.random.uniform(k0, (self.in_features, self.out_dim),
                               jnp.float32, -bound, bound)
        b = jax.random.uniform(k1, (self.out_dim,), jnp.float32, -bound, bound)

        # Weights stored split (pred / conf), COMPACT in N, bf16 for streaming,
        # zero-padded only along K (tiled path).  Biases stay f32.
        wp = jnp.zeros((self.k_pad, self.num_preds), jnp.bfloat16)
        self.w_pred = wp.at[:self.in_features, :].set(
            w[:, :self.num_preds].astype(jnp.bfloat16))
        self.b_pred = b[:self.num_preds].reshape(1, self.num_preds)
        if self.multi_mode:
            wc = jnp.zeros((self.k_pad, self.modes), jnp.bfloat16)
            self.w_conf = wc.at[:self.in_features, :].set(
                w[:, self.num_preds:].astype(jnp.bfloat16))
            self.b_conf = b[self.num_preds:].reshape(1, self.modes)

    # ------------------------------------------------------------------
    @staticmethod
    def _choose_tm(bs: int) -> int:
        if bs <= 64:
            return bs                                   # single tile, no padding
        if bs <= 512:
            return min(256, _round_up((bs + 1) // 2, 16))  # >=2 tiles for v7x megacore
        return 256                                      # 256-wide MXU on v6e/v7x

    # ------------------------------------------------------------------
    def _run_resident(self, x2d, bs):
        K = self.in_features
        tm = self._choose_tm(bs)
        grid_m = pl.cdiv(bs, tm)
        n_conf = self.modes if self.multi_mode else 1

        in_specs = [
            pl.BlockSpec((tm, K), lambda i: (i, 0)),
            pl.BlockSpec((K, self.num_preds), lambda i: (0, 0)),
            pl.BlockSpec((1, self.num_preds), lambda i: (0, 0)),
        ]
        args = [x2d, self.w_pred, self.b_pred]
        if self.multi_mode:
            in_specs += [
                pl.BlockSpec((K, self.modes), lambda i: (0, 0)),
                pl.BlockSpec((1, self.modes), lambda i: (0, 0)),
            ]
            args += [self.w_conf, self.b_conf]
            kernel = _fused_head_kernel_mm
        else:
            kernel = _fused_head_kernel_sm

        out_shape = (jax.ShapeDtypeStruct((bs, self.num_preds), jnp.float32),
                     jax.ShapeDtypeStruct((bs, n_conf), jnp.float32))
        out_specs = (pl.BlockSpec((tm, self.num_preds), lambda i: (i, 0)),
                     pl.BlockSpec((tm, n_conf), lambda i: (i, 0)))

        n_total = self.num_preds + (self.modes if self.multi_mode else 0)
        cost = pl.CostEstimate(
            flops=2 * bs * K * n_total,
            transcendentals=bs * self.modes if self.multi_mode else 0,
            bytes_accessed=(bs * K * 4                      # x (f32)
                            + K * n_total * 2               # W (bf16, fetched once)
                            + (self.num_preds + n_conf) * 4  # biases
                            + bs * (self.num_preds + n_conf) * 4))  # outputs

        vmem_need = (2 * tm * K * 4
                     + 2 * K * (self.num_preds + n_conf) * 2
                     + 2 * tm * (self.num_preds + n_conf) * 4
                     + 4 * 128 * 4)
        vmem_limit = int(min(32 * 2 ** 20, max(16 * 2 ** 20, 2 * vmem_need)))

        return pl.pallas_call(
            kernel,
            out_shape=out_shape,
            grid_spec=pltpu.PrefetchScalarGridSpec(
                num_scalar_prefetch=0,
                grid=(grid_m,),
                in_specs=in_specs,
                out_specs=out_specs,
            ),
            compiler_params=pltpu.CompilerParams(
                dimension_semantics=("parallel",),
                vmem_limit_bytes=vmem_limit,
            ),
            cost_estimate=cost,
        )(*args)

    # ------------------------------------------------------------------
    def _run_ktiled(self, x2d, bs):
        K, Kp, tk = self.in_features, self.k_pad, self.tk
        tm = self._choose_tm(bs)
        m_pad = _round_up(bs, tm)
        n_conf = self.modes if self.multi_mode else 1

        x_p = x2d
        if m_pad != bs or Kp != K:
            x_p = jnp.pad(x2d, ((0, m_pad - bs), (0, Kp - K)))

        grid = (m_pad // tm, Kp // tk)

        in_specs = [
            pl.BlockSpec((tm, tk), lambda i, k: (i, k)),
            pl.BlockSpec((tk, self.num_preds), lambda i, k: (k, 0)),
            pl.BlockSpec((1, self.num_preds), lambda i, k: (0, 0)),
        ]
        args = [x_p, self.w_pred, self.b_pred]
        scratch = [pltpu.VMEM((tm, self.num_preds), jnp.float32)]
        if self.multi_mode:
            in_specs += [
                pl.BlockSpec((tk, self.modes), lambda i, k: (k, 0)),
                pl.BlockSpec((1, self.modes), lambda i, k: (0, 0)),
            ]
            args += [self.w_conf, self.b_conf]
            scratch += [pltpu.VMEM((tm, self.modes), jnp.float32)]
            kernel = _ktiled_head_kernel_mm
        else:
            kernel = _ktiled_head_kernel_sm

        out_shape = (jax.ShapeDtypeStruct((m_pad, self.num_preds), jnp.float32),
                     jax.ShapeDtypeStruct((m_pad, n_conf), jnp.float32))
        out_specs = (pl.BlockSpec((tm, self.num_preds), lambda i, k: (i, 0)),
                     pl.BlockSpec((tm, n_conf), lambda i, k: (i, 0)))

        grid_m = grid[0]
        n_total = self.num_preds + (self.modes if self.multi_mode else 0)
        cost = pl.CostEstimate(
            flops=2 * m_pad * Kp * n_total,
            transcendentals=m_pad * self.modes if self.multi_mode else 0,
            bytes_accessed=(m_pad * Kp * 4
                            + Kp * n_total * 2 * grid_m     # W re-streamed per m-tile
                            + (self.num_preds + n_conf) * 4
                            + m_pad * (self.num_preds + n_conf) * 4))

        vmem_need = (2 * tm * tk * 4
                     + 2 * tk * (self.num_preds + n_conf) * 2
                     + 3 * tm * (self.num_preds + n_conf) * 4
                     + 4 * 128 * 4)
        vmem_limit = int(min(32 * 2 ** 20, max(16 * 2 ** 20, 2 * vmem_need)))

        pred2d, conf = pl.pallas_call(
            kernel,
            out_shape=out_shape,
            grid_spec=pltpu.PrefetchScalarGridSpec(
                num_scalar_prefetch=0,
                grid=grid,
                in_specs=in_specs,
                out_specs=out_specs,
                scratch_shapes=scratch,
            ),
            compiler_params=pltpu.CompilerParams(
                dimension_semantics=("parallel", "arbitrary"),
                vmem_limit_bytes=vmem_limit,
            ),
            cost_estimate=cost,
        )(*args)

        if m_pad != bs:
            pred2d, conf = pred2d[:bs], conf[:bs]
        return pred2d, conf

    # ------------------------------------------------------------------
    def __call__(self, x):
        bs = x.shape[0]
        x2d = x.reshape(bs, -1)            # NCHW -> (B, C*H*W), fed in f32
        if self.resident:
            pred2d, conf = self._run_resident(x2d, bs)
        else:
            pred2d, conf = self._run_ktiled(x2d, bs)
        pred = pred2d.reshape(bs, self.modes, self.future_len, 2)
        return pred, conf


# ----------------------------------------------------------------------------
# Pure-JAX reference (same bf16-rounded operands, f32 math) for verification
# ----------------------------------------------------------------------------
def _reference(model, x):
    bs = x.shape[0]
    x2d = x.reshape(bs, -1).astype(jnp.bfloat16).astype(jnp.float32)
    wp = model.w_pred[:model.in_features].astype(jnp.float32)
    logits_p = jnp.dot(x2d, wp, precision=jax.lax.Precision.HIGHEST) + model.b_pred[0]
    pred = logits_p.reshape(bs, model.modes, model.future_len, 2)
    if model.modes != 1:
        wc = model.w_conf[:model.in_features].astype(jnp.float32)
        logits_c = jnp.dot(x2d, wc, precision=jax.lax.Precision.HIGHEST) + model.b_conf[0]
        conf = jax.nn.softmax(logits_c, axis=1)
    else:
        conf = jnp.ones((bs, 1), jnp.float32)
    return pred, conf


# ----------------------------------------------------------------------------
# Example run
# ----------------------------------------------------------------------------
if __name__ == "__main__":
    config = {
        "model_params": {
            "history_num_frames": 0,     # in_channels = (0+1)*2 + 3 = 5
            "future_num_frames": 10,
            "future_step_size": 2,       # future_len = 5
        },
        "raster_params": {"map_type": "py_semantic"},
    }

    B, H, W = 2, 16, 16

    # --- multi-mode, resident-W fused path (in_features = 1280) ------------
    model3 = RasterModelPallas(config, modes=3, raster_hw=(H, W))
    x = jax.random.normal(jax.random.PRNGKey(0),
                          (B, model3.in_channels, H, W), jnp.float32)
    pred3, conf3 = model3(x)
    jax.block_until_ready((pred3, conf3))
    rp3, rc3 = _reference(model3, x)
    assert pred3.shape == (B, 3, model3.future_len, 2)
    assert conf3.shape == (B, 3)
    assert jnp.allclose(jnp.sum(conf3, axis=1), 1.0, atol=2e-2)
    assert jnp.allclose(pred3, rp3, atol=2e-3, rtol=2e-3)
    assert jnp.allclose(conf3, rc3, atol=2e-2)

    # --- single-mode path (conf = ones emitted by the kernel) --------------
    model1 = RasterModelPallas(config, modes=1, raster_hw=(H, W))
    pred1, conf1 = model1(x)
    jax.block_until_ready((pred1, conf1))
    rp1, _ = _reference(model1, x)
    assert pred1.shape == (B, 1, model1.future_len, 2)
    assert conf1.shape == (B, 1)
    assert jnp.allclose(conf1, 1.0)
    assert jnp.allclose(pred1, rp1, atol=2e-3, rtol=2e-3)

    # --- large-feature backbone -> exercises the K-tiled fallback ----------
    H2, W2 = 32, 48                       # in_features = 5*32*48 = 7680 > 4096
    model_big = RasterModelPallas(config, modes=3, raster_hw=(H2, W2))
    xb = jax.random.normal(jax.random.PRNGKey(1),
                           (B, model_big.in_channels, H2, W2), jnp.float32)
    predb, confb = model_big(xb)
    jax.block_until_ready((predb, confb))
    rpb, rcb = _reference(model_big, xb)
    assert predb.shape == (B, 3, model_big.future_len, 2)
    assert confb.shape == (B, 3)
    assert jnp.allclose(jnp.sum(confb, axis=1), 1.0, atol=2e-2)
    assert jnp.allclose(predb, rpb, atol=3e-3, rtol=3e-3)
    assert jnp.allclose(confb, rcb, atol=2e-2)

    print("KERNEL_OK")
</pallas_src>

<mosaic_0001>
module attributes {stable_mosaic.version = 11 : i64} {
  func.func @_fused_head_kernel_mm(%arg0: i32, %arg1: memref<2x1280xf32, #tpu.memory_space<vmem>>, %arg2: memref<1280x30xbf16, #tpu.memory_space<vmem>>, %arg3: memref<1x30xf32, #tpu.memory_space<vmem>>, %arg4: memref<1280x3xbf16, #tpu.memory_space<vmem>>, %arg5: memref<1x3xf32, #tpu.memory_space<vmem>>, %arg6: memref<2x30xf32, #tpu.memory_space<vmem>>, %arg7: memref<2x3xf32, #tpu.memory_space<vmem>>) attributes {dimension_semantics = [#tpu.dimension_semantics<parallel>], iteration_bounds = array<i64: 1>, scalar_prefetch = 0 : i64, scratch_operands = 0 : i64, tpu.core_type = #tpu.core_type<tc>, window_params = [{transform_indices = @transform_0, window_bounds = array<i64: 2, 1280>}, {pipeline_mode = #tpu.pipeline_mode<synchronous>, transform_indices = @transform_1, window_bounds = array<i64: 1280, 30>}, {pipeline_mode = #tpu.pipeline_mode<synchronous>, transform_indices = @transform_2, window_bounds = array<i64: 1, 30>}, {pipeline_mode = #tpu.pipeline_mode<synchronous>, transform_indices = @transform_3, window_bounds = array<i64: 1280, 3>}, {pipeline_mode = #tpu.pipeline_mode<synchronous>, transform_indices = @transform_4, window_bounds = array<i64: 1, 3>}, {transform_indices = @transform_5, window_bounds = array<i64: 2, 30>}, {transform_indices = @transform_6, window_bounds = array<i64: 2, 3>}]} {
    %c0 = arith.constant 0 : index
    %c0_0 = arith.constant 0 : index
    %0 = vector.load %arg1[%c0, %c0_0] : memref<2x1280xf32, #tpu.memory_space<vmem>>, vector<2x1280xf32>
    %1 = arith.truncf %0 : vector<2x1280xf32> to vector<2x1280xbf16>
    %c0_1 = arith.constant 0 : index
    %c0_2 = arith.constant 0 : index
    %2 = vector.load %arg2[%c0_1, %c0_2] : memref<1280x30xbf16, #tpu.memory_space<vmem>>, vector<1280x30xbf16>
    %cst = arith.constant dense<0.000000e+00> : vector<2x30xf32>
    %3 = tpu.matmul %1, %2, %cst {dimension_numbers = #tpu.dot_dimension_numbers<[1], [0], [0], [1], [0, 0, 1, 1], [], []>} : vector<2x1280xbf16>, vector<1280x30xbf16>, vector<2x30xf32> -> vector<2x30xf32>
    %c0_3 = arith.constant 0 : index
    %c0_4 = arith.constant 0 : index
    %4 = vector.load %arg3[%c0_3, %c0_4] : memref<1x30xf32, #tpu.memory_space<vmem>>, vector<1x30xf32>
    %5 = vector.broadcast %4 : vector<1x30xf32> to vector<2x30xf32>
    %6 = arith.addf %3, %5 : vector<2x30xf32>
    %c0_5 = arith.constant 0 : index
    %c0_6 = arith.constant 0 : index
    %7 = vector.load %arg6[%c0_5, %c0_6] : memref<2x30xf32, #tpu.memory_space<vmem>>, vector<2x30xf32>
    tpu.vector_store %arg6[%c0_5, %c0_6], %6 {strides = array<i32>} : memref<2x30xf32, #tpu.memory_space<vmem>>, vector<2x30xf32>,
    %c0_7 = arith.constant 0 : index
    %c0_8 = arith.constant 0 : index
    %8 = vector.load %arg4[%c0_7, %c0_8] : memref<1280x3xbf16, #tpu.memory_space<vmem>>, vector<1280x3xbf16>
    %cst_9 = arith.constant dense<0.000000e+00> : vector<2x3xf32>
    %9 = tpu.matmul %1, %8, %cst_9 {dimension_numbers = #tpu.dot_dimension_numbers<[1], [0], [0], [1], [0, 0, 1, 1], [], []>} : vector<2x1280xbf16>, vector<1280x3xbf16>, vector<2x3xf32> -> vector<2x3xf32>
    %c0_10 = arith.constant 0 : index
    %c0_11 = arith.constant 0 : index
    %10 = vector.load %arg5[%c0_10, %c0_11] : memref<1x3xf32, #tpu.memory_space<vmem>>, vector<1x3xf32>
    %11 = vector.broadcast %10 : vector<1x3xf32> to vector<2x3xf32>
    %12 = arith.addf %9, %11 : vector<2x3xf32>
    %cst_12 = arith.constant dense<0xFF800000> : vector<2xf32>
    %13 = vector.multi_reduction <maximumf>, %12, %cst_12 [1] : vector<2x3xf32> to vector<2xf32>
    %14 = vector.shape_cast %13 : vector<2xf32> to vector<2x1xf32>
    %15 = vector.broadcast %14 : vector<2x1xf32> to vector<2x3xf32>
    %16 = arith.subf %12, %15 : vector<2x3xf32>
    %17 = math.exp %16 : vector<2x3xf32>
    %cst_13 = arith.constant dense<0.000000e+00> : vector<2xf32>
    %18 = vector.multi_reduction <add>, %17, %cst_13 [1] : vector<2x3xf32> to vector<2xf32>
    %19 = vector.shape_cast %18 : vector<2xf32> to vector<2x1xf32>
    %20 = tpu.reciprocal %19 {approx = true} : vector<2x1xf32> -> vector<2x1xf32>
    %21 = vector.broadcast %20 : vector<2x1xf32> to vector<2x3xf32>
    %22 = arith.mulf %17, %21 : vector<2x3xf32>
    %c0_14 = arith.constant 0 : index
    %c0_15 = arith.constant 0 : index
    %23 = vector.load %arg7[%c0_14, %c0_15] : memref<2x3xf32, #tpu.memory_space<vmem>>, vector<2x3xf32>
    tpu.vector_store %arg7[%c0_14, %c0_15], %22 {strides = array<i32>} : memref<2x3xf32, #tpu.memory_space<vmem>>, vector<2x3xf32>,
    return
  }
  func.func @transform_0(%arg0: i32) -> (i32, i32) {
    %c0_i32 = arith.constant 0 : i32
    %c0_i32_0 = arith.constant 0 : i32
    return %arg0, %c0_i32 : i32, i32
  }
  func.func @transform_1(%arg0: i32) -> (i32, i32) {
    %c0_i32 = arith.constant 0 : i32
    %c0_i32_0 = arith.constant 0 : i32
    %c0_i32_1 = arith.constant 0 : i32
    return %c0_i32, %c0_i32_0 : i32, i32
  }
  func.func @transform_2(%arg0: i32) -> (i32, i32) {
    %c0_i32 = arith.constant 0 : i32
    %c0_i32_0 = arith.constant 0 : i32
    %c0_i32_1 = arith.constant 0 : i32
    return %c0_i32, %c0_i32_0 : i32, i32
  }
  func.func @transform_3(%arg0: i32) -> (i32, i32) {
    %c0_i32 = arith.constant 0 : i32
    %c0_i32_0 = arith.constant 0 : i32
    %c0_i32_1 = arith.constant 0 : i32
    return %c0_i32, %c0_i32_0 : i32, i32
  }
  func.func @transform_4(%arg0: i32) -> (i32, i32) {
    %c0_i32 = arith.constant 0 : i32
    %c0_i32_0 = arith.constant 0 : i32
    %c0_i32_1 = arith.constant 0 : i32
    return %c0_i32, %c0_i32_0 : i32, i32
  }
  func.func @transform_5(%arg0: i32) -> (i32, i32) {
    %c0_i32 = arith.constant 0 : i32
    %c0_i32_0 = arith.constant 0 : i32
    return %arg0, %c0_i32 : i32, i32
  }
  func.func @transform_6(%arg0: i32) -> (i32, i32) {
    %c0_i32 = arith.constant 0 : i32
    %c0_i32_0 = arith.constant 0 : i32
    return %arg0, %c0_i32 : i32, i32
  }
}

</mosaic_0001>

<llo_original>
// kernel: tpu_custom_call.1
$region0: #{tpu_custom_call.1}
  #allocation0 [shape = 'u32[]', space=smem, size = 0x4, offset = 0x4, fixed_abs, tag = 'smem constant byte address 0x4 - core index']
  #allocation1 [shape = 'u32[144,128]{1,0:T(1,128)}', space=vmem, size = 0x12000, scoped, tag = 'internal scratch']
  %s0 = inlined_call_operand.vmem [shape: f32[2,1280], index: 0, kind: input, shape index: {}]
  %s1 = inlined_call_operand.vmem [shape: bf16[1280,30], index: 1, kind: input, shape index: {}]
  %s2 = inlined_call_operand.vmem [shape: f32[1,30], index: 2, kind: input, shape index: {}]
  %s3 = inlined_call_operand.vmem [shape: bf16[1280,3], index: 3, kind: input, shape index: {}]
  %s4 = inlined_call_operand.vmem [shape: f32[1,3], index: 4, kind: input, shape index: {}]
  %s5 = inlined_call_operand.hbm [shape: f32[2,30], index: 5, kind: output, shape index: {0}]
  %s6 = inlined_call_operand.hbm [shape: f32[2,3], index: 6, kind: output, shape index: {1}]
  %7 = xla_tuple %s5, %s6
  %s8 = sld [smem:[#allocation0]]
  $region38: #{tpu_custom_call.1} parent=0
    _
  %s10 = ssub.s32 1, %s8
  %s11 = scalar_select 0, %s10, %s8
  $region1: #{tpu_custom_call.1} parent=0
    #allocation2 [shape = 'u8[1024]{0}', space=vmem, size = 0x400, scoped, tag = 'output window, operand 0, single buffered']
    #allocation3 [shape = 's32[1]{0}', space=sflag, size = 0x4, scoped, tag = 'scoped memory for tpu_custom_call.1']
    #allocation4 [shape = 'u8[1024]{0}', space=vmem, size = 0x400, scoped, tag = 'output window, operand 1, single buffered']
    #allocation5 [shape = 's32[1]{0}', space=sflag, size = 0x4, scoped, tag = 'scoped memory for tpu_custom_call.1']
    %12 = vsyncpa [#allocation3], 0
    %13 = vsyncpa [#allocation5], 0
    // Predicated region
    $region2: #{tpu_custom_call.1} parent=1 // pred_check
      _
    $region3: #{tpu_custom_call.1} parent=1 // pred_check_branch
      %15 = sbr.rel (0) target = $region5
    $region4: #{tpu_custom_call.1} parent=1 // pred_region
      _
    $region5: #{tpu_custom_call.1} parent=1 // pred_fallthru
      _
    // Predicated region
    $region6: #{tpu_custom_call.1} parent=1 // pred_check
      _
    $region7: #{tpu_custom_call.1} parent=1 // pred_check_branch
      %17 = sbr.rel (0) target = $region9
    $region8: #{tpu_custom_call.1} parent=1 // pred_region
      _
    $region9: #{tpu_custom_call.1} parent=1 // pred_fallthru
      _
    // Predicated region
    $region10: #{tpu_custom_call.1} parent=1 // pred_check
      _
    $region11: #{tpu_custom_call.1} parent=1 // pred_check_branch
      %19 = sbr.rel (0) target = $region13
    $region12: #{tpu_custom_call.1} parent=1 // pred_region
      _
    $region13: #{tpu_custom_call.1} parent=1 // pred_fallthru
      _
    // Predicated region
    $region14: #{tpu_custom_call.1} parent=1 // pred_check
      _
    $region15: #{tpu_custom_call.1} parent=1 // pred_check_branch
      %21 = sbr.rel (0) target = $region17
    $region16: #{tpu_custom_call.1} parent=1 // pred_region
      _
    $region17: #{tpu_custom_call.1} parent=1 // pred_fallthru
      _
    // Predicated region
    $region18: #{tpu_custom_call.1} parent=1 // pred_check
      _
    $region19: #{tpu_custom_call.1} parent=1 // pred_check_branch
      %23 = sbr.rel (0) target = $region21
    $region20: #{tpu_custom_call.1} parent=1 // pred_region
      _
    $region21: #{tpu_custom_call.1} parent=1 // pred_fallthru
      _
    %v25 = vld [vmem:[%s0] sm:$0xff]
    %v26 = vld [vmem:[%s0 + $0x8] sm:$0xff]
    %v27 = vld [vmem:[%s0 + $0x10] sm:$0xf]
    %v31 = vcombine.high %v25, %v25
    %v33 = vunpack.c.l.s4 1983009808
    %v34 = vunpack.c.0.s8 %v33
    %v35 = vlaneseq
    %v36 = vshrl.u32 %v35, 7
    %v37 = vsub.s32 %v34, %v36
    %v38 = vrot.slane %v25, %v37
    %v40 = vunpack.c.l.s4 1983009808
    %v41 = vunpack.c.0.s8 %v40
    %v42 = vlaneseq
    %v43 = vshrl.u32 %v42, 7
    %v44 = vsub.s32 %v41, %v43
    %v45 = vrot.slane %v31, %v44
    %v46 = vcombine.high %v38, %v38
    %v47 = vcombine.high %v45, %v45
    %v48 = vcombine.high %v26, %v26
    %v50 = vunpack.c.l.s4 1983009808
    %v51 = vunpack.c.0.s8 %v50
    %v52 = vlaneseq
    %v53 = vshrl.u32 %v52, 7
    %v54 = vsub.s32 %v51, %v53
    %v55 = vrot.slane %v26, %v54
    %v57 = vunpack.c.l.s4 1983009808
    %v58 = vunpack.c.0.s8 %v57
    %v59 = vlaneseq
    %v60 = vshrl.u32 %v59, 7
    %v61 = vsub.s32 %v58, %v60
    %v62 = vrot.slane %v48, %v61
    %v63 = vcombine.high %v55, %v55
    %v64 = vcombine.high %v62, %v62
    %v66 = vunpack.c.l.s4 1983009808
    %v67 = vunpack.c.0.s8 %v66
    %v68 = vlaneseq
    %v69 = vshrl.u32 %v68, 7
    %v70 = vsub.s32 %v67, %v69
    %v71 = vrot.slane %v27, %v70
    %v72 = vcombine.high %v71, %v71
    %v83 = vpack.c.bf16 %v38, %v38
    %v84 = vpack.c.bf16 %v46, %v46
    %v85 = vpack.c.bf16 %v45, %v45
    %v86 = vpack.c.bf16 %v47, %v47
    %v87 = vpack.c.bf16 %v55, %v55
    %v88 = vpack.c.bf16 %v63, %v63
    %v89 = vpack.c.bf16 %v62, %v62
    %v90 = vpack.c.bf16 %v64, %v64
    %v91 = vpack.c.bf16 %v71, %v71
    %v92 = vpack.c.bf16 %v72, %v72
    %v93 = vld [vmem:[%s1] sm:$0xf]
    %v94 = vld [vmem:[%s1 + $0x4] sm:$0xf]
    %v95 = vld [vmem:[%s1 + $0x8] sm:$0xf]
    %v96 = vld [vmem:[%s1 + $0xc] sm:$0xf]
    %v97 = vld [vmem:[%s1 + $0x10] sm:$0xf]
    %v98 = vld [vmem:[%s1 + $0x14] sm:$0xf]
    %v99 = vld [vmem:[%s1 + $0x18] sm:$0xf]
    %v100 = vld [vmem:[%s1 + $0x1c] sm:$0xf]
    %v101 = vld [vmem:[%s1 + $0x20] sm:$0xf]
    %v102 = vld [vmem:[%s1 + $0x24] sm:$0xf]
    %v103 = vld [vmem:[%s1 + $0x28] sm:$0xf]
    %v104 = vld [vmem:[%s1 + $0x2c] sm:$0xf]
    %v105 = vld [vmem:[%s1 + $0x30] sm:$0xf]
    %v106 = vld [vmem:[%s1 + $0x34] sm:$0xf]
    %v107 = vld [vmem:[%s1 + $0x38] sm:$0xf]
    %v108 = vld [vmem:[%s1 + $0x3c] sm:$0xf]
    %v109 = vld [vmem:[%s1 + $0x40] sm:$0xf]
    %v110 = vld [vmem:[%s1 + $0x44] sm:$0xf]
    %v111 = vld [vmem:[%s1 + $0x48] sm:$0xf]
    %v112 = vld [vmem:[%s1 + $0x4c] sm:$0xf]
    %v113 = vld [vmem:[%s1 + $0x50] sm:$0xf]
    %v114 = vld [vmem:[%s1 + $0x54] sm:$0xf]
    %v115 = vld [vmem:[%s1 + $0x58] sm:$0xf]
    %v116 = vld [vmem:[%s1 + $0x5c] sm:$0xf]
    %v117 = vld [vmem:[%s1 + $0x60] sm:$0xf]
    %v118 = vld [vmem:[%s1 + $0x64] sm:$0xf]
    %v119 = vld [vmem:[%s1 + $0x68] sm:$0xf]
    %v120 = vld [vmem:[%s1 + $0x6c] sm:$0xf]
    %v121 = vld [vmem:[%s1 + $0x70] sm:$0xf]
    %v122 = vld [vmem:[%s1 + $0x74] sm:$0xf]
    %v123 = vld [vmem:[%s1 + $0x78] sm:$0xf]
    %v124 = vld [vmem:[%s1 + $0x7c] sm:$0xf]
    %v125 = vld [vmem:[%s1 + $0x80] sm:$0xf]
    %v126 = vld [vmem:[%s1 + $0x84] sm:$0xf]
    %v127 = vld [vmem:[%s1 + $0x88] sm:$0xf]
    %v128 = vld [vmem:[%s1 + $0x8c] sm:$0xf]
    %v129 = vld [vmem:[%s1 + $0x90] sm:$0xf]
    %v130 = vld [vmem:[%s1 + $0x94] sm:$0xf]
    %v131 = vld [vmem:[%s1 + $0x98] sm:$0xf]
    %v132 = vld [vmem:[%s1 + $0x9c] sm:$0xf]
    %v133 = vld [vmem:[%s1 + $0xa0] sm:$0xf]
    %v134 = vld [vmem:[%s1 + $0xa4] sm:$0xf]
    %v135 = vld [vmem:[%s1 + $0xa8] sm:$0xf]
    %v136 = vld [vmem:[%s1 + $0xac] sm:$0xf]
    %v137 = vld [vmem:[%s1 + $0xb0] sm:$0xf]
    %v138 = vld [vmem:[%s1 + $0xb4] sm:$0xf]
    %v139 = vld [vmem:[%s1 + $0xb8] sm:$0xf]
    %v140 = vld [vmem:[%s1 + $0xbc] sm:$0xf]
    %v141 = vld [vmem:[%s1 + $0xc0] sm:$0xf]
    %v142 = vld [vmem:[%s1 + $0xc4] sm:$0xf]
    %v143 = vld [vmem:[%s1 + $0xc8] sm:$0xf]
    %v144 = vld [vmem:[%s1 + $0xcc] sm:$0xf]
    %v145 = vld [vmem:[%s1 + $0xd0] sm:$0xf]
    %v146 = vld [vmem:[%s1 + $0xd4] sm:$0xf]
    %v147 = vld [vmem:[%s1 + $0xd8] sm:$0xf]
    %v148 = vld [vmem:[%s1 + $0xdc] sm:$0xf]
    %v149 = vld [vmem:[%s1 + $0xe0] sm:$0xf]
    %v150 = vld [vmem:[%s1 + $0xe4] sm:$0xf]
    %v151 = vld [vmem:[%s1 + $0xe8] sm:$0xf]
    %v152 = vld [vmem:[%s1 + $0xec] sm:$0xf]
    %v153 = vld [vmem:[%s1 + $0xf0] sm:$0xf]
    %v154 = vld [vmem:[%s1 + $0xf4] sm:$0xf]
    %v155 = vld [vmem:[%s1 + $0xf8] sm:$0xf]
    %v156 = vld [vmem:[%s1 + $0xfc] sm:$0xf]
    %v157 = vld [vmem:[%s1 + $0x100] sm:$0xf]
    %v158 = vld [vmem:[%s1 + $0x104] sm:$0xf]
    %v159 = vld [vmem:[%s1 + $0x108] sm:$0xf]
    %v160 = vld [vmem:[%s1 + $0x10c] sm:$0xf]
    %v161 = vld [vmem:[%s1 + $0x110] sm:$0xf]
    %v162 = vld [vmem:[%s1 + $0x114] sm:$0xf]
    %v163 = vld [vmem:[%s1 + $0x118] sm:$0xf]
    %v164 = vld [vmem:[%s1 + $0x11c] sm:$0xf]
    %v165 = vld [vmem:[%s1 + $0x120] sm:$0xf]
    %v166 = vld [vmem:[%s1 + $0x124] sm:$0xf]
    %v167 = vld [vmem:[%s1 + $0x128] sm:$0xf]
    %v168 = vld [vmem:[%s1 + $0x12c] sm:$0xf]
    %v169 = vld [vmem:[%s1 + $0x130] sm:$0xf]
    %v170 = vld [vmem:[%s1 + $0x134] sm:$0xf]
    %v171 = vld [vmem:[%s1 + $0x138] sm:$0xf]
    %v172 = vld [vmem:[%s1 + $0x13c] sm:$0xf]
    %v173 = vld [vmem:[%s1 + $0x140] sm:$0xf]
    %v174 = vld [vmem:[%s1 + $0x144] sm:$0xf]
    %v175 = vld [vmem:[%s1 + $0x148] sm:$0xf]
    %v176 = vld [vmem:[%s1 + $0x14c] sm:$0xf]
    %v177 = vld [vmem:[%s1 + $0x150] sm:$0xf]
    %v178 = vld [vmem:[%s1 + $0x154] sm:$0xf]
    %v179 = vld [vmem:[%s1 + $0x158] sm:$0xf]
    %v180 = vld [vmem:[%s1 + $0x15c] sm:$0xf]
    %v181 = vld [vmem:[%s1 + $0x160] sm:$0xf]
    %v182 = vld [vmem:[%s1 + $0x164] sm:$0xf]
    %v183 = vld [vmem:[%s1 + $0x168] sm:$0xf]
    %v184 = vld [vmem:[%s1 + $0x16c] sm:$0xf]
    %v185 = vld [vmem:[%s1 + $0x170] sm:$0xf]
    %v186 = vld [vmem:[%s1 + $0x174] sm:$0xf]
    %v187 = vld [vmem:[%s1 + $0x178] sm:$0xf]
    %v188 = vld [vmem:[%s1 + $0x17c] sm:$0xf]
    %v189 = vld [vmem:[%s1 + $0x180] sm:$0xf]
    %v190 = vld [vmem:[%s1 + $0x184] sm:$0xf]
    %v191 = vld [vmem:[%s1 + $0x188] sm:$0xf]
    %v192 = vld [vmem:[%s1 + $0x18c] sm:$0xf]
    %v193 = vld [vmem:[%s1 + $0x190] sm:$0xf]
    %v194 = vld [vmem:[%s1 + $0x194] sm:$0xf]
    %v195 = vld [vmem:[%s1 + $0x198] sm:$0xf]
    %v196 = vld [vmem:[%s1 + $0x19c] sm:$0xf]
    %v197 = vld [vmem:[%s1 + $0x1a0] sm:$0xf]
    %v198 = vld [vmem:[%s1 + $0x1a4] sm:$0xf]
    %v199 = vld [vmem:[%s1 + $0x1a8] sm:$0xf]
    %v200 = vld [vmem:[%s1 + $0x1ac] sm:$0xf]
    %v201 = vld [vmem:[%s1 + $0x1b0] sm:$0xf]
    %v202 = vld [vmem:[%s1 + $0x1b4] sm:$0xf]
    %v203 = vld [vmem:[%s1 + $0x1b8] sm:$0xf]
    %v204 = vld [vmem:[%s1 + $0x1bc] sm:$0xf]
    %v205 = vld [vmem:[%s1 + $0x1c0] sm:$0xf]
    %v206 = vld [vmem:[%s1 + $0x1c4] sm:$0xf]
    %v207 = vld [vmem:[%s1 + $0x1c8] sm:$0xf]
    %v208 = vld [vmem:[%s1 + $0x1cc] sm:$0xf]
    %v209 = vld [vmem:[%s1 + $0x1d0] sm:$0xf]
    %v210 = vld [vmem:[%s1 + $0x1d4] sm:$0xf]
    %v211 = vld [vmem:[%s1 + $0x1d8] sm:$0xf]
    %v212 = vld [vmem:[%s1 + $0x1dc] sm:$0xf]
    %v213 = vld [vmem:[%s1 + $0x1e0] sm:$0xf]
    %v214 = vld [vmem:[%s1 + $0x1e4] sm:$0xf]
    %v215 = vld [vmem:[%s1 + $0x1e8] sm:$0xf]
    %v216 = vld [vmem:[%s1 + $0x1ec] sm:$0xf]
    %v217 = vld [vmem:[%s1 + $0x1f0] sm:$0xf]
    %v218 = vld [vmem:[%s1 + $0x1f4] sm:$0xf]
    %v219 = vld [vmem:[%s1 + $0x1f8] sm:$0xf]
    %v220 = vld [vmem:[%s1 + $0x1fc] sm:$0xf]
    %v221 = vld [vmem:[%s1 + $0x200] sm:$0xf]
    %v222 = vld [vmem:[%s1 + $0x204] sm:$0xf]
    %v223 = vld [vmem:[%s1 + $0x208] sm:$0xf]
    %v224 = vld [vmem:[%s1 + $0x20c] sm:$0xf]
    %v225 = vld [vmem:[%s1 + $0x210] sm:$0xf]
    %v226 = vld [vmem:[%s1 + $0x214] sm:$0xf]
    %v227 = vld [vmem:[%s1 + $0x218] sm:$0xf]
    %v228 = vld [vmem:[%s1 + $0x21c] sm:$0xf]
    %v229 = vld [vmem:[%s1 + $0x220] sm:$0xf]
    %v230 = vld [vmem:[%s1 + $0x224] sm:$0xf]
    %v231 = vld [vmem:[%s1 + $0x228] sm:$0xf]
    %v232 = vld [vmem:[%s1 + $0x22c] sm:$0xf]
    %v233 = vld [vmem:[%s1 + $0x230] sm:$0xf]
    %v234 = vld [vmem:[%s1 + $0x234] sm:$0xf]
    %v235 = vld [vmem:[%s1 + $0x238] sm:$0xf]
    %v236 = vld [vmem:[%s1 + $0x23c] sm:$0xf]
    %v237 = vld [vmem:[%s1 + $0x240] sm:$0xf]
    %v238 = vld [vmem:[%s1 + $0x244] sm:$0xf]
    %v239 = vld [vmem:[%s1 + $0x248] sm:$0xf]
    %v240 = vld [vmem:[%s1 + $0x24c] sm:$0xf]
    %v241 = vld [vmem:[%s1 + $0x250] sm:$0xf]
    %v242 = vld [vmem:[%s1 + $0x254] sm:$0xf]
    %v243 = vld [vmem:[%s1 + $0x258] sm:$0xf]
    %v244 = vld [vmem:[%s1 + $0x25c] sm:$0xf]
    %v245 = vld [vmem:[%s1 + $0x260] sm:$0xf]
    %v246 = vld [vmem:[%s1 + $0x264] sm:$0xf]
    %v247 = vld [vmem:[%s1 + $0x268] sm:$0xf]
    %v248 = vld [vmem:[%s1 + $0x26c] sm:$0xf]
    %v249 = vld [vmem:[%s1 + $0x270] sm:$0xf]
    %v250 = vld [vmem:[%s1 + $0x274] sm:$0xf]
    %v251 = vld [vmem:[%s1 + $0x278] sm:$0xf]
    %v252 = vld [vmem:[%s1 + $0x27c] sm:$0xf]
    %v253 = vld [vmem:[%s2] sm:$0x1]
    %v255 = vlaneseq
    %v256 = vshrl.u32 %v255, 7
    %v257 = vsub.s32 0, %v256
    %v258 = vrot.slane %v253, %v257
    %v420 = vunpack.c.l.b16 %v93
    %v421 = vunpack.c.l.b16 %v94
    %v422 = vunpack.c.l.b16 %v95
    %v423 = vunpack.c.l.b16 %v96
    %v424 = vunpack.c.l.b16 %v97
    %v425 = vunpack.c.l.b16 %v98
    %v426 = vunpack.c.l.b16 %v99
    %v427 = vunpack.c.l.b16 %v100
    %v428 = vunpack.c.l.b16 %v101
    %v429 = vunpack.c.l.b16 %v102
    %v430 = vunpack.c.l.b16 %v103
    %v431 = vunpack.c.l.b16 %v104
    %v432 = vunpack.c.l.b16 %v105
    %v433 = vunpack.c.l.b16 %v106
    %v434 = vunpack.c.l.b16 %v107
    %v435 = vunpack.c.l.b16 %v108
    %v436 = vunpack.c.l.b16 %v109
    %v437 = vunpack.c.l.b16 %v110
    %v438 = vunpack.c.l.b16 %v111
    %v439 = vunpack.c.l.b16 %v112
    %v440 = vunpack.c.l.b16 %v113
    %v441 = vunpack.c.l.b16 %v114
    %v442 = vunpack.c.l.b16 %v115
    %v443 = vunpack.c.l.b16 %v116
    %v444 = vunpack.c.l.b16 %v117
    %v445 = vunpack.c.l.b16 %v118
    %v446 = vunpack.c.l.b16 %v119
    %v447 = vunpack.c.l.b16 %v120
    %v448 = vunpack.c.l.b16 %v121
    %v449 = vunpack.c.l.b16 %v122
    %v450 = vunpack.c.l.b16 %v123
    %v451 = vunpack.c.l.b16 %v124
    %v452 = vunpack.c.l.b16 %v125
    %v453 = vunpack.c.l.b16 %v126
    %v454 = vunpack.c.l.b16 %v127
    %v455 = vunpack.c.l.b16 %v128
    %v456 = vunpack.c.l.b16 %v129
    %v457 = vunpack.c.l.b16 %v130
    %v458 = vunpack.c.l.b16 %v131
    %v459 = vunpack.c.l.b16 %v132
    %v460 = vunpack.c.l.b16 %v133
    %v461 = vunpack.c.l.b16 %v134
    %v462 = vunpack.c.l.b16 %v135
    %v463 = vunpack.c.l.b16 %v136
    %v464 = vunpack.c.l.b16 %v137
    %v465 = vunpack.c.l.b16 %v138
    %v466 = vunpack.c.l.b16 %v139
    %v467 = vunpack.c.l.b16 %v140
    %v468 = vunpack.c.l.b16 %v141
    %v469 = vunpack.c.l.b16 %v142
    %v470 = vunpack.c.l.b16 %v143
    %v471 = vunpack.c.l.b16 %v144
    %v472 = vunpack.c.l.b16 %v145
    %v473 = vunpack.c.l.b16 %v146
    %v474 = vunpack.c.l.b16 %v147
    %v475 = vunpack.c.l.b16 %v148
    %v476 = vunpack.c.l.b16 %v149
    %v477 = vunpack.c.l.b16 %v150
    %v478 = vunpack.c.l.b16 %v151
    %v479 = vunpack.c.l.b16 %v152
    %v480 = vunpack.c.l.b16 %v153
    %v481 = vunpack.c.l.b16 %v154
    %v482 = vunpack.c.l.b16 %v155
    %v483 = vunpack.c.l.b16 %v156
    %v484 = vunpack.c.l.b16 %v157
    %v485 = vunpack.c.l.b16 %v158
    %v486 = vunpack.c.l.b16 %v159
    %v487 = vunpack.c.l.b16 %v160
    %v488 = vunpack.c.l.b16 %v161
    %v489 = vunpack.c.l.b16 %v162
    %v490 = vunpack.c.l.b16 %v163
    %v491 = vunpack.c.l.b16 %v164
    %v492 = vunpack.c.l.b16 %v165
    %v493 = vunpack.c.l.b16 %v166
    %v494 = vunpack.c.l.b16 %v167
    %v495 = vunpack.c.l.b16 %v168
    %v496 = vunpack.c.l.b16 %v169
    %v497 = vunpack.c.l.b16 %v170
    %v498 = vunpack.c.l.b16 %v171
    %v499 = vunpack.c.l.b16 %v172
    %v500 = vunpack.c.l.b16 %v173
    %v501 = vunpack.c.l.b16 %v174
    %v502 = vunpack.c.l.b16 %v175
    %v503 = vunpack.c.l.b16 %v176
    %v504 = vunpack.c.l.b16 %v177
    %v505 = vunpack.c.l.b16 %v178
    %v506 = vunpack.c.l.b16 %v179
    %v507 = vunpack.c.l.b16 %v180
    %v508 = vunpack.c.l.b16 %v181
    %v509 = vunpack.c.l.b16 %v182
    %v510 = vunpack.c.l.b16 %v183
    %v511 = vunpack.c.l.b16 %v184
    %v512 = vunpack.c.l.b16 %v185
    %v513 = vunpack.c.l.b16 %v186
    %v514 = vunpack.c.l.b16 %v187
    %v515 = vunpack.c.l.b16 %v188
    %v516 = vunpack.c.l.b16 %v189
    %v517 = vunpack.c.l.b16 %v190
    %v518 = vunpack.c.l.b16 %v191
    %v519 = vunpack.c.l.b16 %v192
    %v520 = vunpack.c.l.b16 %v193
    %v521 = vunpack.c.l.b16 %v194
    %v522 = vunpack.c.l.b16 %v195
    %v523 = vunpack.c.l.b16 %v196
    %v524 = vunpack.c.l.b16 %v197
    %v525 = vunpack.c.l.b16 %v198
    %v526 = vunpack.c.l.b16 %v199
    %v527 = vunpack.c.l.b16 %v200
    %v528 = vunpack.c.l.b16 %v201
    %v529 = vunpack.c.l.b16 %v202
    %v530 = vunpack.c.l.b16 %v203
    %v531 = vunpack.c.l.b16 %v204
    %v532 = vunpack.c.l.b16 %v205
    %v533 = vunpack.c.l.b16 %v206
    %v534 = vunpack.c.l.b16 %v207
    %v535 = vunpack.c.l.b16 %v208
    %v536 = vunpack.c.l.b16 %v209
    %v537 = vunpack.c.l.b16 %v210
    %v538 = vunpack.c.l.b16 %v211
    %v539 = vunpack.c.l.b16 %v212
    %v540 = vunpack.c.l.b16 %v213
    %v541 = vunpack.c.l.b16 %v214
    %v542 = vunpack.c.l.b16 %v215
    %v543 = vunpack.c.l.b16 %v216
    %v544 = vunpack.c.l.b16 %v217
    %v545 = vunpack.c.l.b16 %v218
    %v546 = vunpack.c.l.b16 %v219
    %v547 = vunpack.c.l.b16 %v220
    %v548 = vunpack.c.l.b16 %v221
    %v549 = vunpack.c.l.b16 %v222
    %v550 = vunpack.c.l.b16 %v223
    %v551 = vunpack.c.l.b16 %v224
    %v552 = vunpack.c.l.b16 %v225
    %v553 = vunpack.c.l.b16 %v226
    %v554 = vunpack.c.l.b16 %v227
    %v555 = vunpack.c.l.b16 %v228
    %v556 = vunpack.c.l.b16 %v229
    %v557 = vunpack.c.l.b16 %v230
    %v558 = vunpack.c.l.b16 %v231
    %v559 = vunpack.c.l.b16 %v232
    %v560 = vunpack.c.l.b16 %v233
    %v561 = vunpack.c.l.b16 %v234
    %v562 = vunpack.c.l.b16 %v235
    %v563 = vunpack.c.l.b16 %v236
    %v564 = vunpack.c.l.b16 %v237
    %v565 = vunpack.c.l.b16 %v238
    %v566 = vunpack.c.l.b16 %v239
    %v567 = vunpack.c.l.b16 %v240
    %v568 = vunpack.c.l.b16 %v241
    %v569 = vunpack.c.l.b16 %v242
    %v570 = vunpack.c.l.b16 %v243
    %v571 = vunpack.c.l.b16 %v244
    %v572 = vunpack.c.l.b16 %v245
    %v573 = vunpack.c.l.b16 %v246
    %v574 = vunpack.c.l.b16 %v247
    %v575 = vunpack.c.l.b16 %v248
    %v576 = vunpack.c.l.b16 %v249
    %v577 = vunpack.c.l.b16 %v250
    %v578 = vunpack.c.l.b16 %v251
    %v579 = vunpack.c.l.b16 %v252
    %v580 = vpack.c.b16 %v421, %v420
    %v581 = vpack.c.b16 %v423, %v422
    %v582 = vpack.c.b16 %v425, %v424
    %v583 = vpack.c.b16 %v427, %v426
    %v584 = vpack.c.b16 %v429, %v428
    %v585 = vpack.c.b16 %v431, %v430
    %v586 = vpack.c.b16 %v433, %v432
    %v587 = vpack.c.b16 %v435, %v434
    %v588 = vpack.c.b16 %v437, %v436
    %v589 = vpack.c.b16 %v439, %v438
    %v590 = vpack.c.b16 %v441, %v440
    %v591 = vpack.c.b16 %v443, %v442
    %v592 = vpack.c.b16 %v445, %v444
    %v593 = vpack.c.b16 %v447, %v446
    %v594 = vpack.c.b16 %v449, %v448
    %v595 = vpack.c.b16 %v451, %v450
    %v596 = vpack.c.b16 %v453, %v452
    %v597 = vpack.c.b16 %v455, %v454
    %v598 = vpack.c.b16 %v457, %v456
    %v599 = vpack.c.b16 %v459, %v458
    %v600 = vpack.c.b16 %v461, %v460
    %v601 = vpack.c.b16 %v463, %v462
    %v602 = vpack.c.b16 %v465, %v464
    %v603 = vpack.c.b16 %v467, %v466
    %v604 = vpack.c.b16 %v469, %v468
    %v605 = vpack.c.b16 %v471, %v470
    %v606 = vpack.c.b16 %v473, %v472
    %v607 = vpack.c.b16 %v475, %v474
    %v608 = vpack.c.b16 %v477, %v476
    %v609 = vpack.c.b16 %v479, %v478
    %v610 = vpack.c.b16 %v481, %v480
    %v611 = vpack.c.b16 %v483, %v482
    %v612 = vpack.c.b16 %v485, %v484
    %v613 = vpack.c.b16 %v487, %v486
    %v614 = vpack.c.b16 %v489, %v488
    %v615 = vpack.c.b16 %v491, %v490
    %v616 = vpack.c.b16 %v493, %v492
    %v617 = vpack.c.b16 %v495, %v494
    %v618 = vpack.c.b16 %v497, %v496
    %v619 = vpack.c.b16 %v499, %v498
    %v620 = vpack.c.b16 %v501, %v500
    %v621 = vpack.c.b16 %v503, %v502
    %v622 = vpack.c.b16 %v505, %v504
    %v623 = vpack.c.b16 %v507, %v506
    %v624 = vpack.c.b16 %v509, %v508
    %v625 = vpack.c.b16 %v511, %v510
    %v626 = vpack.c.b16 %v513, %v512
    %v627 = vpack.c.b16 %v515, %v514
    %v628 = vpack.c.b16 %v517, %v516
    %v629 = vpack.c.b16 %v519, %v518
    %v630 = vpack.c.b16 %v521, %v520
    %v631 = vpack.c.b16 %v523, %v522
    %v632 = vpack.c.b16 %v525, %v524
    %v633 = vpack.c.b16 %v527, %v526
    %v634 = vpack.c.b16 %v529, %v528
    %v635 = vpack.c.b16 %v531, %v530
    %v636 = vpack.c.b16 %v533, %v532
    %v637 = vpack.c.b16 %v535, %v534
    %v638 = vpack.c.b16 %v537, %v536
    %v639 = vpack.c.b16 %v539, %v538
    %v640 = vpack.c.b16 %v541, %v540
    %v641 = vpack.c.b16 %v543, %v542
    %v642 = vpack.c.b16 %v545, %v544
    %v643 = vpack.c.b16 %v547, %v546
    %v644 = vpack.c.b16 %v549, %v548
    %v645 = vpack.c.b16 %v551, %v550
    %v646 = vpack.c.b16 %v553, %v552
    %v647 = vpack.c.b16 %v555, %v554
    %v648 = vpack.c.b16 %v557, %v556
    %v649 = vpack.c.b16 %v559, %v558
    %v650 = vpack.c.b16 %v561, %v560
    %v651 = vpack.c.b16 %v563, %v562
    %v652 = vpack.c.b16 %v565, %v564
    %v653 = vpack.c.b16 %v567, %v566
    %v654 = vpack.c.b16 %v569, %v568
    %v655 = vpack.c.b16 %v571, %v570
    %v656 = vpack.c.b16 %v573, %v572
    %v657 = vpack.c.b16 %v575, %v574
    %v658 = vpack.c.b16 %v577, %v576
    %v659 = vpack.c.b16 %v579, %v578
    %740 = vmatprep.subr.bf16.mxu0 0
    %741 = vmatpush1.bf16.msra.mxu0 %v587
    %742 = vmatprep.subr.bf16.mxu0 0
    %743 = vmatpush1.bf16.msra.mxu0 %v586
    %744 = vmatprep.subr.bf16.mxu0 0
    %745 = vmatpush1.bf16.msra.mxu0 %v585
    %746 = vmatprep.subr.bf16.mxu0 0
    %747 = vmatpush1.bf16.msra.mxu0 %v584
    %748 = vmatprep.subr.bf16.mxu0 0
    %749 = vmatpush1.bf16.msra.mxu0 %v583
    %750 = vmatprep.subr.bf16.mxu0 0
    %751 = vmatpush1.bf16.msra.mxu0 %v582
    %752 = vmatprep.subr.bf16.mxu0 0
    %753 = vmatpush1.bf16.msra.mxu0 %v581
    %754 = vmatprep.subr.bf16.mxu0 0
    %755 = vmatpush1.bf16.msra.mxu0 %v580
    %756 = vmatprep.subr.bf16.mxu0 0
    %757 = vmatpush2.bf16.msra.mxu0 %v595
    %758 = vmatprep.subr.bf16.mxu0 0
    %759 = vmatpush2.bf16.msra.mxu0 %v594
    %760 = vmatprep.subr.bf16.mxu0 0
    %761 = vmatpush2.bf16.msra.mxu0 %v593
    %762 = vmatprep.subr.bf16.mxu0 0
    %763 = vmatpush2.bf16.msra.mxu0 %v592
    %764 = vmatprep.subr.bf16.mxu0 0
    %765 = vmatpush2.bf16.msra.mxu0 %v591
    %766 = vmatprep.subr.bf16.mxu0 0
    %767 = vmatpush2.bf16.msra.mxu0 %v590
    %768 = vmatprep.subr.bf16.mxu0 0
    %769 = vmatpush2.bf16.msra.mxu0 %v589
    %770 = vmatprep.subr.bf16.mxu0 0
    %771 = vmatpush2.bf16.msra.mxu0 %v588
    %772 = vmatprep.mubr.bf16.mxu0 %v84
    %773 = vmatmul.mubr.bf16.gmra.mxu0 %v83
    %v774 = vpop.f32.mrf.mxu0
    %v775 = vadd.f32 %v258, %v774
    %v776 = vpop.f32.mrf.mxu0
    %v777 = vpop.f32.mrf.mxu0
    %v778 = vpop.f32.mrf.mxu0
    %779 = vdwg.mxu0
    %780 = vmatprep.subr.bf16.mxu0 0
    %781 = vmatpush1.bf16.msra.mxu0 %v603
    %782 = vmatprep.subr.bf16.mxu0 0
    %783 = vmatpush1.bf16.msra.mxu0 %v602
    %784 = vmatprep.subr.bf16.mxu0 0
    %785 = vmatpush1.bf16.msra.mxu0 %v601
    %786 = vmatprep.subr.bf16.mxu0 0
    %787 = vmatpush1.bf16.msra.mxu0 %v600
    %788 = vmatprep.subr.bf16.mxu0 0
    %789 = vmatpush1.bf16.msra.mxu0 %v599
    %790 = vmatprep.subr.bf16.mxu0 0
    %791 = vmatpush1.bf16.msra.mxu0 %v598
    %792 = vmatprep.subr.bf16.mxu0 0
    %793 = vmatpush1.bf16.msra.mxu0 %v597
    %794 = vmatprep.subr.bf16.mxu0 0
    %795 = vmatpush1.bf16.msra.mxu0 %v596
    %796 = vmatprep.subr.bf16.mxu0 0
    %797 = vmatpush2.bf16.msra.mxu0 %v611
    %798 = vmatprep.subr.bf16.mxu0 0
    %799 = vmatpush2.bf16.msra.mxu0 %v610
    %800 = vmatprep.subr.bf16.mxu0 0
    %801 = vmatpush2.bf16.msra.mxu0 %v609
    %802 = vmatprep.subr.bf16.mxu0 0
    %803 = vmatpush2.bf16.msra.mxu0 %v608
    %804 = vmatprep.subr.bf16.mxu0 0
    %805 = vmatpush2.bf16.msra.mxu0 %v607
    %806 = vmatprep.subr.bf16.mxu0 0
    %807 = vmatpush2.bf16.msra.mxu0 %v606
    %808 = vmatprep.subr.bf16.mxu0 0
    %809 = vmatpush2.bf16.msra.mxu0 %v605
    %810 = vmatprep.subr.bf16.mxu0 0
    %811 = vmatpush2.bf16.msra.mxu0 %v604
    %812 = vmatprep.mubr.bf16.mxu0 %v86
    %813 = vmatmul.mubr.bf16.gmra.mxu0 %v85
    %v814 = vpop.f32.mrf.mxu0
    %v815 = vadd.f32 %v775, %v814
    %v816 = vpop.f32.mrf.mxu0
    %v817 = vpop.f32.mrf.mxu0
    %v818 = vpop.f32.mrf.mxu0
    %819 = vdwg.mxu0
    %820 = vmatprep.subr.bf16.mxu0 0
    %821 = vmatpush1.bf16.msra.mxu0 %v619
    %822 = vmatprep.subr.bf16.mxu0 0
    %823 = vmatpush1.bf16.msra.mxu0 %v618
    %824 = vmatprep.subr.bf16.mxu0 0
    %825 = vmatpush1.bf16.msra.mxu0 %v617
    %826 = vmatprep.subr.bf16.mxu0 0
    %827 = vmatpush1.bf16.msra.mxu0 %v616
    %828 = vmatprep.subr.bf16.mxu0 0
    %829 = vmatpush1.bf16.msra.mxu0 %v615
    %830 = vmatprep.subr.bf16.mxu0 0
    %831 = vmatpush1.bf16.msra.mxu0 %v614
    %832 = vmatprep.subr.bf16.mxu0 0
    %833 = vmatpush1.bf16.msra.mxu0 %v613
    %834 = vmatprep.subr.bf16.mxu0 0
    %835 = vmatpush1.bf16.msra.mxu0 %v612
    %836 = vmatprep.subr.bf16.mxu0 0
    %837 = vmatpush2.bf16.msra.mxu0 %v627
    %838 = vmatprep.subr.bf16.mxu0 0
    %839 = vmatpush2.bf16.msra.mxu0 %v626
    %840 = vmatprep.subr.bf16.mxu0 0
    %841 = vmatpush2.bf16.msra.mxu0 %v625
    %842 = vmatprep.subr.bf16.mxu0 0
    %843 = vmatpush2.bf16.msra.mxu0 %v624
    %844 = vmatprep.subr.bf16.mxu0 0
    %845 = vmatpush2.bf16.msra.mxu0 %v623
    %846 = vmatprep.subr.bf16.mxu0 0
    %847 = vmatpush2.bf16.msra.mxu0 %v622
    %848 = vmatprep.subr.bf16.mxu0 0
    %849 = vmatpush2.bf16.msra.mxu0 %v621
    %850 = vmatprep.subr.bf16.mxu0 0
    %851 = vmatpush2.bf16.msra.mxu0 %v620
    %852 = vmatprep.mubr.bf16.mxu0 %v88
    %853 = vmatmul.mubr.bf16.gmra.mxu0 %v87
    %v854 = vpop.f32.mrf.mxu0
    %v855 = vadd.f32 %v815, %v854
    %v856 = vpop.f32.mrf.mxu0
    %v857 = vpop.f32.mrf.mxu0
    %v858 = vpop.f32.mrf.mxu0
    %859 = vdwg.mxu0
    %860 = vmatprep.subr.bf16.mxu0 0
    %861 = vmatpush1.bf16.msra.mxu0 %v635
    %862 = vmatprep.subr.bf16.mxu0 0
    %863 = vmatpush1.bf16.msra.mxu0 %v634
    %864 = vmatprep.subr.bf16.mxu0 0
    %865 = vmatpush1.bf16.msra.mxu0 %v633
    %866 = vmatprep.subr.bf16.mxu0 0
    %867 = vmatpush1.bf16.msra.mxu0 %v632
    %868 = vmatprep.subr.bf16.mxu0 0
    %869 = vmatpush1.bf16.msra.mxu0 %v631
    %870 = vmatprep.subr.bf16.mxu0 0
    %871 = vmatpush1.bf16.msra.mxu0 %v630
    %872 = vmatprep.subr.bf16.mxu0 0
    %873 = vmatpush1.bf16.msra.mxu0 %v629
    %874 = vmatprep.subr.bf16.mxu0 0
    %875 = vmatpush1.bf16.msra.mxu0 %v628
    %876 = vmatprep.subr.bf16.mxu0 0
    %877 = vmatpush2.bf16.msra.mxu0 %v643
    %878 = vmatprep.subr.bf16.mxu0 0
    %879 = vmatpush2.bf16.msra.mxu0 %v642
    %880 = vmatprep.subr.bf16.mxu0 0
    %881 = vmatpush2.bf16.msra.mxu0 %v641
    %882 = vmatprep.subr.bf16.mxu0 0
    %883 = vmatpush2.bf16.msra.mxu0 %v640
    %884 = vmatprep.subr.bf16.mxu0 0
    %885 = vmatpush2.bf16.msra.mxu0 %v639
    %886 = vmatprep.subr.bf16.mxu0 0
    %887 = vmatpush2.bf16.msra.mxu0 %v638
    %888 = vmatprep.subr.bf16.mxu0 0
    %889 = vmatpush2.bf16.msra.mxu0 %v637
    %890 = vmatprep.subr.bf16.mxu0 0
    %891 = vmatpush2.bf16.msra.mxu0 %v636
    %892 = vmatprep.mubr.bf16.mxu0 %v90
    %893 = vmatmul.mubr.bf16.gmra.mxu0 %v89
    %v894 = vpop.f32.mrf.mxu0
    %v895 = vadd.f32 %v855, %v894
    %v896 = vpop.f32.mrf.mxu0
    %v897 = vpop.f32.mrf.mxu0
    %v898 = vpop.f32.mrf.mxu0
    %899 = vdwg.mxu0
    %900 = vmatprep.subr.bf16.mxu0 0
    %901 = vmatpush1.bf16.msra.mxu0 %v651
    %902 = vmatprep.subr.bf16.mxu0 0
    %903 = vmatpush1.bf16.msra.mxu0 %v650
    %904 = vmatprep.subr.bf16.mxu0 0
    %905 = vmatpush1.bf16.msra.mxu0 %v649
    %906 = vmatprep.subr.bf16.mxu0 0
    %907 = vmatpush1.bf16.msra.mxu0 %v648
    %908 = vmatprep.subr.bf16.mxu0 0
    %909 = vmatpush1.bf16.msra.mxu0 %v647
    %910 = vmatprep.subr.bf16.mxu0 0
    %911 = vmatpush1.bf16.msra.mxu0 %v646
    %912 = vmatprep.subr.bf16.mxu0 0
    %913 = vmatpush1.bf16.msra.mxu0 %v645
    %914 = vmatprep.subr.bf16.mxu0 0
    %915 = vmatpush1.bf16.msra.mxu0 %v644
    %916 = vmatprep.subr.bf16.mxu0 0
    %917 = vmatpush2.bf16.msra.mxu0 %v659
    %918 = vmatprep.subr.bf16.mxu0 0
    %919 = vmatpush2.bf16.msra.mxu0 %v658
    %920 = vmatprep.subr.bf16.mxu0 0
    %921 = vmatpush2.bf16.msra.mxu0 %v657
    %922 = vmatprep.subr.bf16.mxu0 0
    %923 = vmatpush2.bf16.msra.mxu0 %v656
    %924 = vmatprep.subr.bf16.mxu0 0
    %925 = vmatpush2.bf16.msra.mxu0 %v655
    %926 = vmatprep.subr.bf16.mxu0 0
    %927 = vmatpush2.bf16.msra.mxu0 %v654
    %928 = vmatprep.subr.bf16.mxu0 0
    %929 = vmatpush2.bf16.msra.mxu0 %v653
    %930 = vmatprep.subr.bf16.mxu0 0
    %931 = vmatpush2.bf16.msra.mxu0 %v652
    %932 = vmatprep.mubr.bf16.mxu0 %v92
    %933 = vmatmul.mubr.bf16.gmra.mxu0 %v91
    %v934 = vpop.f32.mrf.mxu0
    %v935 = vadd.f32 %v895, %v934
    %v936 = vpop.f32.mrf.mxu0
    %v937 = vpop.f32.mrf.mxu0
    %v938 = vpop.f32.mrf.mxu0
    %939 = vdwg.mxu0
    %vm940 = vcmask 238592
    %941 = vst.msk [vmem:[#allocation2] sm:$0x3] %vm940, %v935
    %v942 = vld [vmem:[%s3] sm:$0xf]
    %v943 = vld [vmem:[%s3 + $0x4] sm:$0xf]
    %v944 = vld [vmem:[%s3 + $0x8] sm:$0xf]
    %v945 = vld [vmem:[%s3 + $0xc] sm:$0xf]
    %v946 = vld [vmem:[%s3 + $0x10] sm:$0xf]
    %v947 = vld [vmem:[%s3 + $0x14] sm:$0xf]
    %v948 = vld [vmem:[%s3 + $0x18] sm:$0xf]
    %v949 = vld [vmem:[%s3 + $0x1c] sm:$0xf]
    %v950 = vld [vmem:[%s3 + $0x20] sm:$0xf]
    %v951 = vld [vmem:[%s3 + $0x24] sm:$0xf]
    %v952 = vld [vmem:[%s3 + $0x28] sm:$0xf]
    %v953 = vld [vmem:[%s3 + $0x2c] sm:$0xf]
    %v954 = vld [vmem:[%s3 + $0x30] sm:$0xf]
    %v955 = vld [vmem:[%s3 + $0x34] sm:$0xf]
    %v956 = vld [vmem:[%s3 + $0x38] sm:$0xf]
    %v957 = vld [vmem:[%s3 + $0x3c] sm:$0xf]
    %v958 = vld [vmem:[%s3 + $0x40] sm:$0xf]
    %v959 = vld [vmem:[%s3 + $0x44] sm:$0xf]
    %v960 = vld [vmem:[%s3 + $0x48] sm:$0xf]
    %v961 = vld [vmem:[%s3 + $0x4c] sm:$0xf]
    %v962 = vld [vmem:[%s3 + $0x50] sm:$0xf]
    %v963 = vld [vmem:[%s3 + $0x54] sm:$0xf]
    %v964 = vld [vmem:[%s3 + $0x58] sm:$0xf]
    %v965 = vld [vmem:[%s3 + $0x5c] sm:$0xf]
    %v966 = vld [vmem:[%s3 + $0x60] sm:$0xf]
    %v967 = vld [vmem:[%s3 + $0x64] sm:$0xf]
    %v968 = vld [vmem:[%s3 + $0x68] sm:$0xf]
    %v969 = vld [vmem:[%s3 + $0x6c] sm:$0xf]
    %v970 = vld [vmem:[%s3 + $0x70] sm:$0xf]
    %v971 = vld [vmem:[%s3 + $0x74] sm:$0xf]
    %v972 = vld [vmem:[%s3 + $0x78] sm:$0xf]
    %v973 = vld [vmem:[%s3 + $0x7c] sm:$0xf]
    %v974 = vld [vmem:[%s3 + $0x80] sm:$0xf]
    %v975 = vld [vmem:[%s3 + $0x84] sm:$0xf]
    %v976 = vld [vmem:[%s3 + $0x88] sm:$0xf]
    %v977 = vld [vmem:[%s3 + $0x8c] sm:$0xf]
    %v978 = vld [vmem:[%s3 + $0x90] sm:$0xf]
    %v979 = vld [vmem:[%s3 + $0x94] sm:$0xf]
    %v980 = vld [vmem:[%s3 + $0x98] sm:$0xf]
    %v981 = vld [vmem:[%s3 + $0x9c] sm:$0xf]
    %v982 = vld [vmem:[%s3 + $0xa0] sm:$0xf]
    %v983 = vld [vmem:[%s3 + $0xa4] sm:$0xf]
    %v984 = vld [vmem:[%s3 + $0xa8] sm:$0xf]
    %v985 = vld [vmem:[%s3 + $0xac] sm:$0xf]
    %v986 = vld [vmem:[%s3 + $0xb0] sm:$0xf]
    %v987 = vld [vmem:[%s3 + $0xb4] sm:$0xf]
    %v988 = vld [vmem:[%s3 + $0xb8] sm:$0xf]
    %v989 = vld [vmem:[%s3 + $0xbc] sm:$0xf]
    %v990 = vld [vmem:[%s3 + $0xc0] sm:$0xf]
    %v991 = vld [vmem:[%s3 + $0xc4] sm:$0xf]
    %v992 = vld [vmem:[%s3 + $0xc8] sm:$0xf]
    %v993 = vld [vmem:[%s3 + $0xcc] sm:$0xf]
    %v994 = vld [vmem:[%s3 + $0xd0] sm:$0xf]
    %v995 = vld [vmem:[%s3 + $0xd4] sm:$0xf]
    %v996 = vld [vmem:[%s3 + $0xd8] sm:$0xf]
    %v997 = vld [vmem:[%s3 + $0xdc] sm:$0xf]
    %v998 = vld [vmem:[%s3 + $0xe0] sm:$0xf]
    %v999 = vld [vmem:[%s3 + $0xe4] sm:$0xf]
    %v1000 = vld [vmem:[%s3 + $0xe8] sm:$0xf]
    %v1001 = vld [vmem:[%s3 + $0xec] sm:$0xf]
    %v1002 = vld [vmem:[%s3 + $0xf0] sm:$0xf]
    %v1003 = vld [vmem:[%s3 + $0xf4] sm:$0xf]
    %v1004 = vld [vmem:[%s3 + $0xf8] sm:$0xf]
    %v1005 = vld [vmem:[%s3 + $0xfc] sm:$0xf]
    %v1006 = vld [vmem:[%s3 + $0x100] sm:$0xf]
    %v1007 = vld [vmem:[%s3 + $0x104] sm:$0xf]
    %v1008 = vld [vmem:[%s3 + $0x108] sm:$0xf]
    %v1009 = vld [vmem:[%s3 + $0x10c] sm:$0xf]
    %v1010 = vld [vmem:[%s3 + $0x110] sm:$0xf]
    %v1011 = vld [vmem:[%s3 + $0x114] sm:$0xf]
    %v1012 = vld [vmem:[%s3 + $0x118] sm:$0xf]
    %v1013 = vld [vmem:[%s3 + $0x11c] sm:$0xf]
    %v1014 = vld [vmem:[%s3 + $0x120] sm:$0xf]
    %v1015 = vld [vmem:[%s3 + $0x124] sm:$0xf]
    %v1016 = vld [vmem:[%s3 + $0x128] sm:$0xf]
    %v1017 = vld [vmem:[%s3 + $0x12c] sm:$0xf]
    %v1018 = vld [vmem:[%s3 + $0x130] sm:$0xf]
    %v1019 = vld [vmem:[%s3 + $0x134] sm:$0xf]
    %v1020 = vld [vmem:[%s3 + $0x138] sm:$0xf]
    %v1021 = vld [vmem:[%s3 + $0x13c] sm:$0xf]
    %v1022 = vld [vmem:[%s3 + $0x140] sm:$0xf]
    %v1023 = vld [vmem:[%s3 + $0x144] sm:$0xf]
    %v1024 = vld [vmem:[%s3 + $0x148] sm:$0xf]
    %v1025 = vld [vmem:[%s3 + $0x14c] sm:$0xf]
    %v1026 = vld [vmem:[%s3 + $0x150] sm:$0xf]
    %v1027 = vld [vmem:[%s3 + $0x154] sm:$0xf]
    %v1028 = vld [vmem:[%s3 + $0x158] sm:$0xf]
    %v1029 = vld [vmem:[%s3 + $0x15c] sm:$0xf]
    %v1030 = vld [vmem:[%s3 + $0x160] sm:$0xf]
    %v1031 = vld [vmem:[%s3 + $0x164] sm:$0xf]
    %v1032 = vld [vmem:[%s3 + $0x168] sm:$0xf]
    %v1033 = vld [vmem:[%s3 + $0x16c] sm:$0xf]
    %v1034 = vld [vmem:[%s3 + $0x170] sm:$0xf]
    %v1035 = vld [vmem:[%s3 + $0x174] sm:$0xf]
    %v1036 = vld [vmem:[%s3 + $0x178] sm:$0xf]
    %v1037 = vld [vmem:[%s3 + $0x17c] sm:$0xf]
    %v1038 = vld [vmem:[%s3 + $0x180] sm:$0xf]
    %v1039 = vld [vmem:[%s3 + $0x184] sm:$0xf]
    %v1040 = vld [vmem:[%s3 + $0x188] sm:$0xf]
    %v1041 = vld [vmem:[%s3 + $0x18c] sm:$0xf]
    %v1042 = vld [vmem:[%s3 + $0x190] sm:$0xf]
    %v1043 = vld [vmem:[%s3 + $0x194] sm:$0xf]
    %v1044 = vld [vmem:[%s3 + $0x198] sm:$0xf]
    %v1045 = vld [vmem:[%s3 + $0x19c] sm:$0xf]
    %v1046 = vld [vmem:[%s3 + $0x1a0] sm:$0xf]
    %v1047 = vld [vmem:[%s3 + $0x1a4] sm:$0xf]
    %v1048 = vld [vmem:[%s3 + $0x1a8] sm:$0xf]
    %v1049 = vld [vmem:[%s3 + $0x1ac] sm:$0xf]
    %v1050 = vld [vmem:[%s3 + $0x1b0] sm:$0xf]
    %v1051 = vld [vmem:[%s3 + $0x1b4] sm:$0xf]
    %v1052 = vld [vmem:[%s3 + $0x1b8] sm:$0xf]
    %v1053 = vld [vmem:[%s3 + $0x1bc] sm:$0xf]
    %v1054 = vld [vmem:[%s3 + $0x1c0] sm:$0xf]
    %v1055 = vld [vmem:[%s3 + $0x1c4] sm:$0xf]
    %v1056 = vld [vmem:[%s3 + $0x1c8] sm:$0xf]
    %v1057 = vld [vmem:[%s3 + $0x1cc] sm:$0xf]
    %v1058 = vld [vmem:[%s3 + $0x1d0] sm:$0xf]
    %v1059 = vld [vmem:[%s3 + $0x1d4] sm:$0xf]
    %v1060 = vld [vmem:[%s3 + $0x1d8] sm:$0xf]
    %v1061 = vld [vmem:[%s3 + $0x1dc] sm:$0xf]
    %v1062 = vld [vmem:[%s3 + $0x1e0] sm:$0xf]
    %v1063 = vld [vmem:[%s3 + $0x1e4] sm:$0xf]
    %v1064 = vld [vmem:[%s3 + $0x1e8] sm:$0xf]
    %v1065 = vld [vmem:[%s3 + $0x1ec] sm:$0xf]
    %v1066 = vld [vmem:[%s3 + $0x1f0] sm:$0xf]
    %v1067 = vld [vmem:[%s3 + $0x1f4] sm:$0xf]
    %v1068 = vld [vmem:[%s3 + $0x1f8] sm:$0xf]
    %v1069 = vld [vmem:[%s3 + $0x1fc] sm:$0xf]
    %v1070 = vld [vmem:[%s3 + $0x200] sm:$0xf]
    %v1071 = vld [vmem:[%s3 + $0x204] sm:$0xf]
    %v1072 = vld [vmem:[%s3 + $0x208] sm:$0xf]
    %v1073 = vld [vmem:[%s3 + $0x20c] sm:$0xf]
    %v1074 = vld [vmem:[%s3 + $0x210] sm:$0xf]
    %v1075 = vld [vmem:[%s3 + $0x214] sm:$0xf]
    %v1076 = vld [vmem:[%s3 + $0x218] sm:$0xf]
    %v1077 = vld [vmem:[%s3 + $0x21c] sm:$0xf]
    %v1078 = vld [vmem:[%s3 + $0x220] sm:$0xf]
    %v1079 = vld [vmem:[%s3 + $0x224] sm:$0xf]
    %v1080 = vld [vmem:[%s3 + $0x228] sm:$0xf]
    %v1081 = vld [vmem:[%s3 + $0x22c] sm:$0xf]
    %v1082 = vld [vmem:[%s3 + $0x230] sm:$0xf]
    %v1083 = vld [vmem:[%s3 + $0x234] sm:$0xf]
    %v1084 = vld [vmem:[%s3 + $0x238] sm:$0xf]
    %v1085 = vld [vmem:[%s3 + $0x23c] sm:$0xf]
    %v1086 = vld [vmem:[%s3 + $0x240] sm:$0xf]
    %v1087 = vld [vmem:[%s3 + $0x244] sm:$0xf]
    %v1088 = vld [vmem:[%s3 + $0x248] sm:$0xf]
    %v1089 = vld [vmem:[%s3 + $0x24c] sm:$0xf]
    %v1090 = vld [vmem:[%s3 + $0x250] sm:$0xf]
    %v1091 = vld [vmem:[%s3 + $0x254] sm:$0xf]
    %v1092 = vld [vmem:[%s3 + $0x258] sm:$0xf]
    %v1093 = vld [vmem:[%s3 + $0x25c] sm:$0xf]
    %v1094 = vld [vmem:[%s3 + $0x260] sm:$0xf]
    %v1095 = vld [vmem:[%s3 + $0x264] sm:$0xf]
    %v1096 = vld [vmem:[%s3 + $0x268] sm:$0xf]
    %v1097 = vld [vmem:[%s3 + $0x26c] sm:$0xf]
    %v1098 = vld [vmem:[%s3 + $0x270] sm:$0xf]
    %v1099 = vld [vmem:[%s3 + $0x274] sm:$0xf]
    %v1100 = vld [vmem:[%s3 + $0x278] sm:$0xf]
    %v1101 = vld [vmem:[%s3 + $0x27c] sm:$0xf]
    %v1102 = vld [vmem:[%s4] sm:$0x1]
    %v1104 = vlaneseq
    %v1105 = vshrl.u32 %v1104, 7
    %v1106 = vsub.s32 0, %v1105
    %v1107 = vrot.slane %v1102, %v1106
    %v1269 = vunpack.c.l.b16 %v942
    %v1270 = vunpack.c.l.b16 %v943
    %v1271 = vunpack.c.l.b16 %v944
    %v1272 = vunpack.c.l.b16 %v945
    %v1273 = vunpack.c.l.b16 %v946
    %v1274 = vunpack.c.l.b16 %v947
    %v1275 = vunpack.c.l.b16 %v948
    %v1276 = vunpack.c.l.b16 %v949
    %v1277 = vunpack.c.l.b16 %v950
    %v1278 = vunpack.c.l.b16 %v951
    %v1279 = vunpack.c.l.b16 %v952
    %v1280 = vunpack.c.l.b16 %v953
    %v1281 = vunpack.c.l.b16 %v954
    %v1282 = vunpack.c.l.b16 %v955
    %v1283 = vunpack.c.l.b16 %v956
    %v1284 = vunpack.c.l.b16 %v957
    %v1285 = vunpack.c.l.b16 %v958
    %v1286 = vunpack.c.l.b16 %v959
    %v1287 = vunpack.c.l.b16 %v960
    %v1288 = vunpack.c.l.b16 %v961
    %v1289 = vunpack.c.l.b16 %v962
    %v1290 = vunpack.c.l.b16 %v963
    %v1291 = vunpack.c.l.b16 %v964
    %v1292 = vunpack.c.l.b16 %v965
    %v1293 = vunpack.c.l.b16 %v966
    %v1294 = vunpack.c.l.b16 %v967
    %v1295 = vunpack.c.l.b16 %v968
    %v1296 = vunpack.c.l.b16 %v969
    %v1297 = vunpack.c.l.b16 %v970
    %v1298 = vunpack.c.l.b16 %v971
    %v1299 = vunpack.c.l.b16 %v972
    %v1300 = vunpack.c.l.b16 %v973
    %v1301 = vunpack.c.l.b16 %v974
    %v1302 = vunpack.c.l.b16 %v975
    %v1303 = vunpack.c.l.b16 %v976
    %v1304 = vunpack.c.l.b16 %v977
    %v1305 = vunpack.c.l.b16 %v978
    %v1306 = vunpack.c.l.b16 %v979
    %v1307 = vunpack.c.l.b16 %v980
    %v1308 = vunpack.c.l.b16 %v981
    %v1309 = vunpack.c.l.b16 %v982
    %v1310 = vunpack.c.l.b16 %v983
    %v1311 = vunpack.c.l.b16 %v984
    %v1312 = vunpack.c.l.b16 %v985
    %v1313 = vunpack.c.l.b16 %v986
    %v1314 = vunpack.c.l.b16 %v987
    %v1315 = vunpack.c.l.b16 %v988
    %v1316 = vunpack.c.l.b16 %v989
    %v1317 = vunpack.c.l.b16 %v990
    %v1318 = vunpack.c.l.b16 %v991
    %v1319 = vunpack.c.l.b16 %v992
    %v1320 = vunpack.c.l.b16 %v993
    %v1321 = vunpack.c.l.b16 %v994
    %v1322 = vunpack.c.l.b16 %v995
    %v1323 = vunpack.c.l.b16 %v996
    %v1324 = vunpack.c.l.b16 %v997
    %v1325 = vunpack.c.l.b16 %v998
    %v1326 = vunpack.c.l.b16 %v999
    %v1327 = vunpack.c.l.b16 %v1000
    %v1328 = vunpack.c.l.b16 %v1001
    %v1329 = vunpack.c.l.b16 %v1002
    %v1330 = vunpack.c.l.b16 %v1003
    %v1331 = vunpack.c.l.b16 %v1004
    %v1332 = vunpack.c.l.b16 %v1005
    %v1333 = vunpack.c.l.b16 %v1006
    %v1334 = vunpack.c.l.b16 %v1007
    %v1335 = vunpack.c.l.b16 %v1008
    %v1336 = vunpack.c.l.b16 %v1009
    %v1337 = vunpack.c.l.b16 %v1010
    %v1338 = vunpack.c.l.b16 %v1011
    %v1339 = vunpack.c.l.b16 %v1012
    %v1340 = vunpack.c.l.b16 %v1013
    %v1341 = vunpack.c.l.b16 %v1014
    %v1342 = vunpack.c.l.b16 %v1015
    %v1343 = vunpack.c.l.b16 %v1016
    %v1344 = vunpack.c.l.b16 %v1017
    %v1345 = vunpack.c.l.b16 %v1018
    %v1346 = vunpack.c.l.b16 %v1019
    %v1347 = vunpack.c.l.b16 %v1020
    %v1348 = vunpack.c.l.b16 %v1021
    %v1349 = vunpack.c.l.b16 %v1022
    %v1350 = vunpack.c.l.b16 %v1023
    %v1351 = vunpack.c.l.b16 %v1024
    %v1352 = vunpack.c.l.b16 %v1025
    %v1353 = vunpack.c.l.b16 %v1026
    %v1354 = vunpack.c.l.b16 %v1027
    %v1355 = vunpack.c.l.b16 %v1028
    %v1356 = vunpack.c.l.b16 %v1029
    %v1357 = vunpack.c.l.b16 %v1030
    %v1358 = vunpack.c.l.b16 %v1031
    %v1359 = vunpack.c.l.b16 %v1032
    %v1360 = vunpack.c.l.b16 %v1033
    %v1361 = vunpack.c.l.b16 %v1034
    %v1362 = vunpack.c.l.b16 %v1035
    %v1363 = vunpack.c.l.b16 %v1036
    %v1364 = vunpack.c.l.b16 %v1037
    %v1365 = vunpack.c.l.b16 %v1038
    %v1366 = vunpack.c.l.b16 %v1039
    %v1367 = vunpack.c.l.b16 %v1040
    %v1368 = vunpack.c.l.b16 %v1041
    %v1369 = vunpack.c.l.b16 %v1042
    %v1370 = vunpack.c.l.b16 %v1043
    %v1371 = vunpack.c.l.b16 %v1044
    %v1372 = vunpack.c.l.b16 %v1045
    %v1373 = vunpack.c.l.b16 %v1046
    %v1374 = vunpack.c.l.b16 %v1047
    %v1375 = vunpack.c.l.b16 %v1048
    %v1376 = vunpack.c.l.b16 %v1049
    %v1377 = vunpack.c.l.b16 %v1050
    %v1378 = vunpack.c.l.b16 %v1051
    %v1379 = vunpack.c.l.b16 %v1052
    %v1380 = vunpack.c.l.b16 %v1053
    %v1381 = vunpack.c.l.b16 %v1054
    %v1382 = vunpack.c.l.b16 %v1055
    %v1383 = vunpack.c.l.b16 %v1056
    %v1384 = vunpack.c.l.b16 %v1057
    %v1385 = vunpack.c.l.b16 %v1058
    %v1386 = vunpack.c.l.b16 %v1059
    %v1387 = vunpack.c.l.b16 %v1060
    %v1388 = vunpack.c.l.b16 %v1061
    %v1389 = vunpack.c.l.b16 %v1062
    %v1390 = vunpack.c.l.b16 %v1063
    %v1391 = vunpack.c.l.b16 %v1064
    %v1392 = vunpack.c.l.b16 %v1065
    %v1393 = vunpack.c.l.b16 %v1066
    %v1394 = vunpack.c.l.b16 %v1067
    %v1395 = vunpack.c.l.b16 %v1068
    %v1396 = vunpack.c.l.b16 %v1069
    %v1397 = vunpack.c.l.b16 %v1070
    %v1398 = vunpack.c.l.b16 %v1071
    %v1399 = vunpack.c.l.b16 %v1072
    %v1400 = vunpack.c.l.b16 %v1073
    %v1401 = vunpack.c.l.b16 %v1074
    %v1402 = vunpack.c.l.b16 %v1075
    %v1403 = vunpack.c.l.b16 %v1076
    %v1404 = vunpack.c.l.b16 %v1077
    %v1405 = vunpack.c.l.b16 %v1078
    %v1406 = vunpack.c.l.b16 %v1079
    %v1407 = vunpack.c.l.b16 %v1080
    %v1408 = vunpack.c.l.b16 %v1081
    %v1409 = vunpack.c.l.b16 %v1082
    %v1410 = vunpack.c.l.b16 %v1083
    %v1411 = vunpack.c.l.b16 %v1084
    %v1412 = vunpack.c.l.b16 %v1085
    %v1413 = vunpack.c.l.b16 %v1086
    %v1414 = vunpack.c.l.b16 %v1087
    %v1415 = vunpack.c.l.b16 %v1088
    %v1416 = vunpack.c.l.b16 %v1089
    %v1417 = vunpack.c.l.b16 %v1090
    %v1418 = vunpack.c.l.b16 %v1091
    %v1419 = vunpack.c.l.b16 %v1092
    %v1420 = vunpack.c.l.b16 %v1093
    %v1421 = vunpack.c.l.b16 %v1094
    %v1422 = vunpack.c.l.b16 %v1095
    %v1423 = vunpack.c.l.b16 %v1096
    %v1424 = vunpack.c.l.b16 %v1097
    %v1425 = vunpack.c.l.b16 %v1098
    %v1426 = vunpack.c.l.b16 %v1099
    %v1427 = vunpack.c.l.b16 %v1100
    %v1428 = vunpack.c.l.b16 %v1101
    %v1429 = vpack.c.b16 %v1270, %v1269
    %v1430 = vpack.c.b16 %v1272, %v1271
    %v1431 = vpack.c.b16 %v1274, %v1273
    %v1432 = vpack.c.b16 %v1276, %v1275
    %v1433 = vpack.c.b16 %v1278, %v1277
    %v1434 = vpack.c.b16 %v1280, %v1279
    %v1435 = vpack.c.b16 %v1282, %v1281
    %v1436 = vpack.c.b16 %v1284, %v1283
    %v1437 = vpack.c.b16 %v1286, %v1285
    %v1438 = vpack.c.b16 %v1288, %v1287
    %v1439 = vpack.c.b16 %v1290, %v1289
    %v1440 = vpack.c.b16 %v1292, %v1291
    %v1441 = vpack.c.b16 %v1294, %v1293
    %v1442 = vpack.c.b16 %v1296, %v1295
    %v1443 = vpack.c.b16 %v1298, %v1297
    %v1444 = vpack.c.b16 %v1300, %v1299
    %v1445 = vpack.c.b16 %v1302, %v1301
    %v1446 = vpack.c.b16 %v1304, %v1303
    %v1447 = vpack.c.b16 %v1306, %v1305
    %v1448 = vpack.c.b16 %v1308, %v1307
    %v1449 = vpack.c.b16 %v1310, %v1309
    %v1450 = vpack.c.b16 %v1312, %v1311
    %v1451 = vpack.c.b16 %v1314, %v1313
    %v1452 = vpack.c.b16 %v1316, %v1315
    %v1453 = vpack.c.b16 %v1318, %v1317
    %v1454 = vpack.c.b16 %v1320, %v1319
    %v1455 = vpack.c.b16 %v1322, %v1321
    %v1456 = vpack.c.b16 %v1324, %v1323
    %v1457 = vpack.c.b16 %v1326, %v1325
    %v1458 = vpack.c.b16 %v1328, %v1327
    %v1459 = vpack.c.b16 %v1330, %v1329
    %v1460 = vpack.c.b16 %v1332, %v1331
    %v1461 = vpack.c.b16 %v1334, %v1333
    %v1462 = vpack.c.b16 %v1336, %v1335
    %v1463 = vpack.c.b16 %v1338, %v1337
    %v1464 = vpack.c.b16 %v1340, %v1339
    %v1465 = vpack.c.b16 %v1342, %v1341
    %v1466 = vpack.c.b16 %v1344, %v1343
    %v1467 = vpack.c.b16 %v1346, %v1345
    %v1468 = vpack.c.b16 %v1348, %v1347
    %v1469 = vpack.c.b16 %v1350, %v1349
    %v1470 = vpack.c.b16 %v1352, %v1351
    %v1471 = vpack.c.b16 %v1354, %v1353
    %v1472 = vpack.c.b16 %v1356, %v1355
    %v1473 = vpack.c.b16 %v1358, %v1357
    %v1474 = vpack.c.b16 %v1360, %v1359
    %v1475 = vpack.c.b16 %v1362, %v1361
    %v1476 = vpack.c.b16 %v1364, %v1363
    %v1477 = vpack.c.b16 %v1366, %v1365
    %v1478 = vpack.c.b16 %v1368, %v1367
    %v1479 = vpack.c.b16 %v1370, %v1369
    %v1480 = vpack.c.b16 %v1372, %v1371
    %v1481 = vpack.c.b16 %v1374, %v1373
    %v1482 = vpack.c.b16 %v1376, %v1375
    %v1483 = vpack.c.b16 %v1378, %v1377
    %v1484 = vpack.c.b16 %v1380, %v1379
    %v1485 = vpack.c.b16 %v1382, %v1381
    %v1486 = vpack.c.b16 %v1384, %v1383
    %v1487 = vpack.c.b16 %v1386, %v1385
    %v1488 = vpack.c.b16 %v1388, %v1387
    %v1489 = vpack.c.b16 %v1390, %v1389
    %v1490 = vpack.c.b16 %v1392, %v1391
    %v1491 = vpack.c.b16 %v1394, %v1393
    %v1492 = vpack.c.b16 %v1396, %v1395
    %v1493 = vpack.c.b16 %v1398, %v1397
    %v1494 = vpack.c.b16 %v1400, %v1399
    %v1495 = vpack.c.b16 %v1402, %v1401
    %v1496 = vpack.c.b16 %v1404, %v1403
    %v1497 = vpack.c.b16 %v1406, %v1405
    %v1498 = vpack.c.b16 %v1408, %v1407
    %v1499 = vpack.c.b16 %v1410, %v1409
    %v1500 = vpack.c.b16 %v1412, %v1411
    %v1501 = vpack.c.b16 %v1414, %v1413
    %v1502 = vpack.c.b16 %v1416, %v1415
    %v1503 = vpack.c.b16 %v1418, %v1417
    %v1504 = vpack.c.b16 %v1420, %v1419
    %v1505 = vpack.c.b16 %v1422, %v1421
    %v1506 = vpack.c.b16 %v1424, %v1423
    %v1507 = vpack.c.b16 %v1426, %v1425
    %v1508 = vpack.c.b16 %v1428, %v1427
    %1589 = vmatprep.subr.bf16.mxu0 0
    %1590 = vmatpush1.bf16.msra.mxu0 %v1436
    %1591 = vmatprep.subr.bf16.mxu0 0
    %1592 = vmatpush1.bf16.msra.mxu0 %v1435
    %1593 = vmatprep.subr.bf16.mxu0 0
    %1594 = vmatpush1.bf16.msra.mxu0 %v1434
    %1595 = vmatprep.subr.bf16.mxu0 0
    %1596 = vmatpush1.bf16.msra.mxu0 %v1433
    %1597 = vmatprep.subr.bf16.mxu0 0
    %1598 = vmatpush1.bf16.msra.mxu0 %v1432
    %1599 = vmatprep.subr.bf16.mxu0 0
    %1600 = vmatpush1.bf16.msra.mxu0 %v1431
    %1601 = vmatprep.subr.bf16.mxu0 0
    %1602 = vmatpush1.bf16.msra.mxu0 %v1430
    %1603 = vmatprep.subr.bf16.mxu0 0
    %1604 = vmatpush1.bf16.msra.mxu0 %v1429
    %1605 = vmatprep.subr.bf16.mxu0 0
    %1606 = vmatpush2.bf16.msra.mxu0 %v1444
    %1607 = vmatprep.subr.bf16.mxu0 0
    %1608 = vmatpush2.bf16.msra.mxu0 %v1443
    %1609 = vmatprep.subr.bf16.mxu0 0
    %1610 = vmatpush2.bf16.msra.mxu0 %v1442
    %1611 = vmatprep.subr.bf16.mxu0 0
    %1612 = vmatpush2.bf16.msra.mxu0 %v1441
    %1613 = vmatprep.subr.bf16.mxu0 0
    %1614 = vmatpush2.bf16.msra.mxu0 %v1440
    %1615 = vmatprep.subr.bf16.mxu0 0
    %1616 = vmatpush2.bf16.msra.mxu0 %v1439
    %1617 = vmatprep.subr.bf16.mxu0 0
    %1618 = vmatpush2.bf16.msra.mxu0 %v1438
    %1619 = vmatprep.subr.bf16.mxu0 0
    %1620 = vmatpush2.bf16.msra.mxu0 %v1437
    %1621 = vmatprep.mubr.bf16.mxu0 %v84
    %1622 = vmatmul.mubr.bf16.gmra.mxu0 %v83
    %v1623 = vpop.f32.mrf.mxu0
    %v1624 = vadd.f32 %v1107, %v1623
    %v1625 = vpop.f32.mrf.mxu0
    %v1626 = vpop.f32.mrf.mxu0
    %v1627 = vpop.f32.mrf.mxu0
    %1628 = vdwg.mxu0
    %1629 = vmatprep.subr.bf16.mxu0 0
    %1630 = vmatpush1.bf16.msra.mxu0 %v1452
    %1631 = vmatprep.subr.bf16.mxu0 0
    %1632 = vmatpush1.bf16.msra.mxu0 %v1451
    %1633 = vmatprep.subr.bf16.mxu0 0
    %1634 = vmatpush1.bf16.msra.mxu0 %v1450
    %1635 = vmatprep.subr.bf16.mxu0 0
    %1636 = vmatpush1.bf16.msra.mxu0 %v1449
    %1637 = vmatprep.subr.bf16.mxu0 0
    %1638 = vmatpush1.bf16.msra.mxu0 %v1448
    %1639 = vmatprep.subr.bf16.mxu0 0
    %1640 = vmatpush1.bf16.msra.mxu0 %v1447
    %1641 = vmatprep.subr.bf16.mxu0 0
    %1642 = vmatpush1.bf16.msra.mxu0 %v1446
    %1643 = vmatprep.subr.bf16.mxu0 0
    %1644 = vmatpush1.bf16.msra.mxu0 %v1445
    %1645 = vmatprep.subr.bf16.mxu0 0
    %1646 = vmatpush2.bf16.msra.mxu0 %v1460
    %1647 = vmatprep.subr.bf16.mxu0 0
    %1648 = vmatpush2.bf16.msra.mxu0 %v1459
    %1649 = vmatprep.subr.bf16.mxu0 0
    %1650 = vmatpush2.bf16.msra.mxu0 %v1458
    %1651 = vmatprep.subr.bf16.mxu0 0
    %1652 = vmatpush2.bf16.msra.mxu0 %v1457
    %1653 = vmatprep.subr.bf16.mxu0 0
    %1654 = vmatpush2.bf16.msra.mxu0 %v1456
    %1655 = vmatprep.subr.bf16.mxu0 0
    %1656 = vmatpush2.bf16.msra.mxu0 %v1455
    %1657 = vmatprep.subr.bf16.mxu0 0
    %1658 = vmatpush2.bf16.msra.mxu0 %v1454
    %1659 = vmatprep.subr.bf16.mxu0 0
    %1660 = vmatpush2.bf16.msra.mxu0 %v1453
    %1661 = vmatprep.mubr.bf16.mxu0 %v86
    %1662 = vmatmul.mubr.bf16.gmra.mxu0 %v85
    %v1663 = vpop.f32.mrf.mxu0
    %v1664 = vadd.f32 %v1624, %v1663
    %v1665 = vpop.f32.mrf.mxu0
    %v1666 = vpop.f32.mrf.mxu0
    %v1667 = vpop.f32.mrf.mxu0
    %1668 = vdwg.mxu0
    %1669 = vmatprep.subr.bf16.mxu0 0
    %1670 = vmatpush1.bf16.msra.mxu0 %v1468
    %1671 = vmatprep.subr.bf16.mxu0 0
    %1672 = vmatpush1.bf16.msra.mxu0 %v1467
    %1673 = vmatprep.subr.bf16.mxu0 0
    %1674 = vmatpush1.bf16.msra.mxu0 %v1466
    %1675 = vmatprep.subr.bf16.mxu0 0
    %1676 = vmatpush1.bf16.msra.mxu0 %v1465
    %1677 = vmatprep.subr.bf16.mxu0 0
    %1678 = vmatpush1.bf16.msra.mxu0 %v1464
    %1679 = vmatprep.subr.bf16.mxu0 0
    %1680 = vmatpush1.bf16.msra.mxu0 %v1463
    %1681 = vmatprep.subr.bf16.mxu0 0
    %1682 = vmatpush1.bf16.msra.mxu0 %v1462
    %1683 = vmatprep.subr.bf16.mxu0 0
    %1684 = vmatpush1.bf16.msra.mxu0 %v1461
    %1685 = vmatprep.subr.bf16.mxu0 0
    %1686 = vmatpush2.bf16.msra.mxu0 %v1476
    %1687 = vmatprep.subr.bf16.mxu0 0
    %1688 = vmatpush2.bf16.msra.mxu0 %v1475
    %1689 = vmatprep.subr.bf16.mxu0 0
    %1690 = vmatpush2.bf16.msra.mxu0 %v1474
    %1691 = vmatprep.subr.bf16.mxu0 0
    %1692 = vmatpush2.bf16.msra.mxu0 %v1473
    %1693 = vmatprep.subr.bf16.mxu0 0
    %1694 = vmatpush2.bf16.msra.mxu0 %v1472
    %1695 = vmatprep.subr.bf16.mxu0 0
    %1696 = vmatpush2.bf16.msra.mxu0 %v1471
    %1697 = vmatprep.subr.bf16.mxu0 0
    %1698 = vmatpush2.bf16.msra.mxu0 %v1470
    %1699 = vmatprep.subr.bf16.mxu0 0
    %1700 = vmatpush2.bf16.msra.mxu0 %v1469
    %1701 = vmatprep.mubr.bf16.mxu0 %v88
    %1702 = vmatmul.mubr.bf16.gmra.mxu0 %v87
    %v1703 = vpop.f32.mrf.mxu0
    %v1704 = vadd.f32 %v1664, %v1703
    %v1705 = vpop.f32.mrf.mxu0
    %v1706 = vpop.f32.mrf.mxu0
    %v1707 = vpop.f32.mrf.mxu0
    %1708 = vdwg.mxu0
    %1709 = vmatprep.subr.bf16.mxu0 0
    %1710 = vmatpush1.bf16.msra.mxu0 %v1484
    %1711 = vmatprep.subr.bf16.mxu0 0
    %1712 = vmatpush1.bf16.msra.mxu0 %v1483
    %1713 = vmatprep.subr.bf16.mxu0 0
    %1714 = vmatpush1.bf16.msra.mxu0 %v1482
    %1715 = vmatprep.subr.bf16.mxu0 0
    %1716 = vmatpush1.bf16.msra.mxu0 %v1481
    %1717 = vmatprep.subr.bf16.mxu0 0
    %1718 = vmatpush1.bf16.msra.mxu0 %v1480
    %1719 = vmatprep.subr.bf16.mxu0 0
    %1720 = vmatpush1.bf16.msra.mxu0 %v1479
    %1721 = vmatprep.subr.bf16.mxu0 0
    %1722 = vmatpush1.bf16.msra.mxu0 %v1478
    %1723 = vmatprep.subr.bf16.mxu0 0
    %1724 = vmatpush1.bf16.msra.mxu0 %v1477
    %1725 = vmatprep.subr.bf16.mxu0 0
    %1726 = vmatpush2.bf16.msra.mxu0 %v1492
    %1727 = vmatprep.subr.bf16.mxu0 0
    %1728 = vmatpush2.bf16.msra.mxu0 %v1491
    %1729 = vmatprep.subr.bf16.mxu0 0
    %1730 = vmatpush2.bf16.msra.mxu0 %v1490
    %1731 = vmatprep.subr.bf16.mxu0 0
    %1732 = vmatpush2.bf16.msra.mxu0 %v1489
    %1733 = vmatprep.subr.bf16.mxu0 0
    %1734 = vmatpush2.bf16.msra.mxu0 %v1488
    %1735 = vmatprep.subr.bf16.mxu0 0
    %1736 = vmatpush2.bf16.msra.mxu0 %v1487
    %1737 = vmatprep.subr.bf16.mxu0 0
    %1738 = vmatpush2.bf16.msra.mxu0 %v1486
    %1739 = vmatprep.subr.bf16.mxu0 0
    %1740 = vmatpush2.bf16.msra.mxu0 %v1485
    %1741 = vmatprep.mubr.bf16.mxu0 %v90
    %1742 = vmatmul.mubr.bf16.gmra.mxu0 %v89
    %v1743 = vpop.f32.mrf.mxu0
    %v1744 = vadd.f32 %v1704, %v1743
    %v1745 = vpop.f32.mrf.mxu0
    %v1746 = vpop.f32.mrf.mxu0
    %v1747 = vpop.f32.mrf.mxu0
    %1748 = vdwg.mxu0
    %1749 = vmatprep.subr.bf16.mxu0 0
    %1750 = vmatpush1.bf16.msra.mxu0 %v1500
    %1751 = vmatprep.subr.bf16.mxu0 0
    %1752 = vmatpush1.bf16.msra.mxu0 %v1499
    %1753 = vmatprep.subr.bf16.mxu0 0
    %1754 = vmatpush1.bf16.msra.mxu0 %v1498
    %1755 = vmatprep.subr.bf16.mxu0 0
    %1756 = vmatpush1.bf16.msra.mxu0 %v1497
    %1757 = vmatprep.subr.bf16.mxu0 0
    %1758 = vmatpush1.bf16.msra.mxu0 %v1496
    %1759 = vmatprep.subr.bf16.mxu0 0
    %1760 = vmatpush1.bf16.msra.mxu0 %v1495
    %1761 = vmatprep.subr.bf16.mxu0 0
    %1762 = vmatpush1.bf16.msra.mxu0 %v1494
    %1763 = vmatprep.subr.bf16.mxu0 0
    %1764 = vmatpush1.bf16.msra.mxu0 %v1493
    %1765 = vmatprep.subr.bf16.mxu0 0
    %1766 = vmatpush2.bf16.msra.mxu0 %v1508
    %1767 = vmatprep.subr.bf16.mxu0 0
    %1768 = vmatpush2.bf16.msra.mxu0 %v1507
    %1769 = vmatprep.subr.bf16.mxu0 0
    %1770 = vmatpush2.bf16.msra.mxu0 %v1506
    %1771 = vmatprep.subr.bf16.mxu0 0
    %1772 = vmatpush2.bf16.msra.mxu0 %v1505
    %1773 = vmatprep.subr.bf16.mxu0 0
    %1774 = vmatpush2.bf16.msra.mxu0 %v1504
    %1775 = vmatprep.subr.bf16.mxu0 0
    %1776 = vmatpush2.bf16.msra.mxu0 %v1503
    %1777 = vmatprep.subr.bf16.mxu0 0
    %1778 = vmatpush2.bf16.msra.mxu0 %v1502
    %1779 = vmatprep.subr.bf16.mxu0 0
    %1780 = vmatpush2.bf16.msra.mxu0 %v1501
    %1781 = vmatprep.mubr.bf16.mxu0 %v92
    %1782 = vmatmul.mubr.bf16.gmra.mxu0 %v91
    %v1783 = vpop.f32.mrf.mxu0
    %v1784 = vadd.f32 %v1744, %v1783
    %v1785 = vpop.f32.mrf.mxu0
    %v1786 = vpop.f32.mrf.mxu0
    %v1787 = vpop.f32.mrf.mxu0
    %1788 = vdwg.mxu0
    %vm1789 = vcmask 17408
    %v1790 = vsel %vm1789, %v1784, -inf
    %1791 = vmax.xlane.f32.xlu0 %v1790
    %v1792 = vpop.xlane.xlu0 %1791
    %v1793 = vsub.f32 %v1784, %v1792
    %v1794 = vmul.f32 %v1793, 1.442695
    %v1795 = vpow.pop %v1794
    %v1796 = vsel %vm1789, %v1795, 0.0
    %1797 = vadd.xlane.f32.xlu0 %v1796
    %v1798 = vpop.xlane.xlu0 %1797
    %v1799 = vrcp.pop %v1798
    %v1800 = vmul.f32 %v1795, %v1799
    %1801 = vst.msk [vmem:[#allocation4] sm:$0x3] %vm1789, %v1800
    // Predicated region
    $region22: #{tpu_custom_call.1} parent=1 // pred_check
      _
    $region23: #{tpu_custom_call.1} parent=1 // pred_check_branch
      %1803 = sbr.rel (0) target = $region25
    $region24: #{tpu_custom_call.1} parent=1 // pred_region
      %s1805 = ssub.s32 32, 32
      %1806 = vsyncadd [#allocation3], %s1805
      %s1808 = sshll.u32 [#allocation2], 4
      %s1809 = int_to_ptr.vmem [resolvable:$true] %s1808
      %1811 = dma.vmem_to_hbm [thread:$0]  %s1809, 32, %s5, [#allocation3]
    $region25: #{tpu_custom_call.1} parent=1 // pred_fallthru
      _
    // Predicated region
    $region26: #{tpu_custom_call.1} parent=1 // pred_check
      _
    $region27: #{tpu_custom_call.1} parent=1 // pred_check_branch
      %1813 = sbr.rel (0) target = $region29
    $region28: #{tpu_custom_call.1} parent=1 // pred_region
      %s1815 = ssub.s32 32, 32
      %1816 = vsyncadd [#allocation5], %s1815
      %s1818 = sshll.u32 [#allocation4], 4
      %s1819 = int_to_ptr.vmem [resolvable:$true] %s1818
      %1821 = dma.vmem_to_hbm [thread:$0]  %s1819, 32, %s6, [#allocation5]
    $region29: #{tpu_custom_call.1} parent=1 // pred_fallthru
      _
    // Predicated region
    $region30: #{tpu_custom_call.1} parent=1 // pred_check
      _
    $region31: #{tpu_custom_call.1} parent=1 // pred_check_branch
      %1823 = sbr.rel (0) target = $region33
    $region32: #{tpu_custom_call.1} parent=1 // pred_region
      %1824 = dma.done [#allocation3], 32
    $region33: #{tpu_custom_call.1} parent=1 // pred_fallthru
      _
    // Predicated region
    $region34: #{tpu_custom_call.1} parent=1 // pred_check
      _
    $region35: #{tpu_custom_call.1} parent=1 // pred_check_branch
      %1826 = sbr.rel (0) target = $region37
    $region36: #{tpu_custom_call.1} parent=1 // pred_region
      %1827 = dma.done [#allocation5], 32
    $region37: #{tpu_custom_call.1} parent=1 // pred_fallthru
      _
    %1828 = vsyncpa [#allocation3], 1
    %1829 = vsyncpa [#allocation5], 1

</llo_original>
